<compile_context>
chip_gen: v7x
topology: tpu7x:2x2x1
jax: 0.10.0
libtpu: 0.0.40
codegen_flags: <defaults>
</compile_context>

<pallas_src>
import jax
import jax.numpy as jnp
from jax.experimental import pallas as pl
from jax.experimental.pallas import tpu as pltpu

BN_EPS = 1e-5
LANE = 128
SUBLANE_BF16 = 16
MAX_BATCH_TILE = 128


def _round_up(x, m):
    return ((x + m - 1) // m) * m


def make_mlp_kernel(layer_meta, n_groups, action_dim):
    """Fused MLP kernel.

    layer_meta: tuple of (group_idx, row_offset, in_dim, out_dim) per layer (static,
                padded dims). Weight group g is a bf16 buffer of shape (rows_g, out_dim_g);
                layer k's weight is rows [row_offset, row_offset+in_dim) of its group.
    Ref order: x (bf16), w_group_0..w_group_{G-1} (bf16), bias_pack (f32), out (f32).
    """
    n_layers = len(layer_meta)

    def kernel(*refs):
        x_ref = refs[0]
        w_refs = refs[1 : 1 + n_groups]
        b_ref = refs[1 + n_groups]
        out_ref = refs[2 + n_groups]

        h = x_ref[...]  # bf16 (tile, K_pad), pre-cast host-side
        for k, (g, row_off, din, dout) in enumerate(layer_meta):
            w = w_refs[g][row_off : row_off + din, :]     # static 128-aligned view, bf16
            b = b_ref[pl.ds(k, 1), pl.ds(0, dout)]        # (1, dout) f32
            y = jnp.dot(h, w, preferred_element_type=jnp.float32) + b
            if k < n_layers - 1:
                # ReLU (Dropout(0.1) = identity in eval mode; BatchNorm folded into the
                # next Linear host-side). f32 epilogue, bf16 only right before next dot.
                h = jnp.maximum(y, 0.0).astype(jnp.bfloat16)
            else:
                out_ref[...] = y[:, :action_dim]

    return kernel


def init_params(key, state_dim, action_dim, hidden_dims):
    """Synthetic params, shapes matching the PyTorch module (W stored as (in, out)).

    BN running stats / affine params are non-trivial so the BN-folding math is actually
    exercised by the correctness check.
    """
    params = {"hidden": []}
    in_dim = state_dim
    for hd in hidden_dims:
        key, kw, kb, kg, kbe, km, kv = jax.random.split(key, 7)
        w = jax.random.normal(kw, (in_dim, hd), jnp.float32) * (1.0 / jnp.sqrt(in_dim))
        b = jax.random.normal(kb, (1, hd), jnp.float32) * 0.01
        params["hidden"].append(
            dict(
                w=w,
                b=b,
                gamma=jax.random.uniform(kg, (1, hd), jnp.float32, 0.5, 1.5),
                beta=jax.random.normal(kbe, (1, hd), jnp.float32) * 0.1,
                rm=jax.random.normal(km, (1, hd), jnp.float32) * 0.1,
                rv=jax.random.uniform(kv, (1, hd), jnp.float32, 0.5, 1.5),
            )
        )
        in_dim = hd
    key, kw, kb = jax.random.split(key, 3)
    params["out_w"] = jax.random.normal(kw, (in_dim, action_dim), jnp.float32) * (
        1.0 / jnp.sqrt(in_dim)
    )
    params["out_b"] = jax.random.normal(kb, (1, action_dim), jnp.float32) * 0.01
    return params


def fold_and_pack_params(params, state_dim):
    """One-time host-side prep:
      * fold eval-mode BN into the following Linear,
      * pad K (state_dim) and every out dim up to multiples of 128 with zeros,
      * cast weights to bf16, group them by padded out width into one buffer per width,
      * pack biases into a single f32 buffer.
    """
    hidden = params["hidden"]
    n_hidden = len(hidden)

    # BN affine applied to the ReLU output of block k:  bn(a) = a * s_k + t_k
    ss, ts = [], []
    for p in hidden:
        s = (p["gamma"] * jax.lax.rsqrt(p["rv"] + BN_EPS)).reshape(-1)
        t = p["beta"].reshape(-1) - p["rm"].reshape(-1) * s
        ss.append(s)
        ts.append(t)

    # Fold BN_k into Linear_{k+1} (and BN_{last} into the output Linear).
    Ws = [hidden[0]["w"]]
    bs = [hidden[0]["b"].reshape(-1)]
    for k in range(1, n_hidden):
        Ws.append(hidden[k]["w"] * ss[k - 1][:, None])
        bs.append(hidden[k]["b"].reshape(-1) + ts[k - 1] @ hidden[k]["w"])
    Ws.append(params["out_w"] * ss[-1][:, None])
    bs.append(params["out_b"].reshape(-1) + ts[-1] @ params["out_w"])

    n_layers = len(Ws)
    outs = [w.shape[1] for w in Ws]
    pouts = [_round_up(o, LANE) for o in outs]
    k_pad = _round_up(state_dim, LANE)
    pins = [k_pad] + pouts[:-1]
    max_out = max(pouts)

    # Zero-pad each weight to (pin, pout); padded features stay exactly zero through ReLU.
    padded = []
    for k, w in enumerate(Ws):
        wp = jnp.pad(w, ((0, pins[k] - w.shape[0]), (0, pouts[k] - w.shape[1])))
        padded.append(wp.astype(jnp.bfloat16))

    # Group by padded out width -> one vertically concatenated bf16 buffer per width.
    group_order = []       # distinct widths, first-seen order
    group_rows = {}        # width -> rows consumed so far
    group_members = {}     # width -> list of padded weights
    layer_meta = []
    for k, w in enumerate(padded):
        width = pouts[k]
        if width not in group_rows:
            group_order.append(width)
            group_rows[width] = 0
            group_members[width] = []
        layer_meta.append((group_order.index(width), group_rows[width], pins[k], width))
        group_members[width].append(w)
        group_rows[width] += pins[k]
    weight_groups = [jnp.concatenate(group_members[wd], axis=0) for wd in group_order]

    bias_pack = jnp.stack(
        [jnp.pad(bs[k], (0, max_out - bs[k].shape[0])) for k in range(n_layers)]
    ).astype(jnp.float32)

    return dict(
        weight_groups=weight_groups,
        bias=bias_pack,
        layer_meta=tuple(layer_meta),
        k_pad=k_pad,
        action_dim=params["out_b"].shape[-1],
    )


def advanced_rl_forward(state, packed):
    wgs = packed["weight_groups"]
    bias = packed["bias"]
    layer_meta = packed["layer_meta"]
    k_pad = packed["k_pad"]
    action_dim = packed["action_dim"]

    batch, state_dim = state.shape

    # Batch tile: multiple of 16 (bf16 sublane packing), capped at 128 rows. At 128 the
    # whole kernel footprint (weights + activations, double-buffered x/out) is < 2 MiB,
    # comfortably inside v7x's 64 MiB / default scoped VMEM on all generations.
    tile = min(MAX_BATCH_TILE, _round_up(batch, SUBLANE_BF16))
    batch_pad = _round_up(batch, tile)

    # Pre-pad (batch -> tile multiple, K -> 128) and pre-cast to bf16 so the x DMA is
    # half the bytes and the kernel needs no layer-0 cast and no masked K handling.
    x = jnp.pad(state, ((0, batch_pad - batch), (0, k_pad - state_dim))).astype(
        jnp.bfloat16
    )

    grid = (batch_pad // tile,)
    kernel = make_mlp_kernel(layer_meta, len(wgs), action_dim)

    flops = 2 * batch_pad * sum(din * dout for (_, _, din, dout) in layer_meta)
    bytes_accessed = (
        x.size * 2
        + sum(int(w.size) * 2 for w in wgs)
        + int(bias.size) * 4
        + batch_pad * action_dim * 4
    )

    out = pl.pallas_call(
        kernel,
        out_shape=jax.ShapeDtypeStruct((batch_pad, action_dim), jnp.float32),
        grid=grid,
        in_specs=(
            [pl.BlockSpec((tile, k_pad), lambda i: (i, 0))]
            # Weights / bias: same block for every grid step -> VMEM-resident, no re-DMA.
            + [pl.BlockSpec(w.shape, lambda i: (0, 0)) for w in wgs]
            + [pl.BlockSpec(bias.shape, lambda i: (0, 0))]
        ),
        out_specs=pl.BlockSpec((tile, action_dim), lambda i: (i, 0)),
        compiler_params=pltpu.CompilerParams(dimension_semantics=("parallel",)),
        cost_estimate=pl.CostEstimate(
            flops=flops, transcendentals=0, bytes_accessed=bytes_accessed
        ),
    )(x, *wgs, bias)

    if batch_pad != batch:
        out = out[:batch]
    return out


def reference_forward(state, params):
    """Pure-JAX f32 reference with the original (un-folded) eval-mode semantics."""
    h = state
    for p in params["hidden"]:
        y = h @ p["w"] + p["b"]
        y = jnp.maximum(y, 0.0)
        h = (y - p["rm"]) * jax.lax.rsqrt(p["rv"] + BN_EPS) * p["gamma"] + p["beta"]
    return h @ params["out_w"] + params["out_b"]


if __name__ == "__main__":
    # Shapes consistent with the module: state_dim=32, action_dim=8,
    # default hidden_dims=[512, 256, 128, 64].
    state_dim, action_dim = 32, 8
    hidden_dims = [512, 256, 128, 64]

    key = jax.random.PRNGKey(0)
    key, kx_big, kx_small = jax.random.split(key, 3)
    params = init_params(key, state_dim, action_dim, hidden_dims)
    packed = fold_and_pack_params(params, state_dim)

    # Batched case (stacked envs/timesteps): exercises the batch grid (2 tiles of 128,
    # sharded across both TensorCores on v7x via "parallel").
    state_big = jax.random.normal(kx_big, (256, state_dim), jnp.float32)
    out_big = jax.block_until_ready(advanced_rl_forward(state_big, packed))
    ref_big = reference_forward(state_big, params)
    assert out_big.shape == (256, action_dim)
    assert jnp.allclose(out_big, ref_big, atol=5e-2, rtol=5e-2), "mismatch (batch=256)"

    # Small actor-step batch: exercises the batch-padding path (8 -> 16 rows).
    state_small = jax.random.normal(kx_small, (8, state_dim), jnp.float32)
    out_small = jax.block_until_ready(advanced_rl_forward(state_small, packed))
    ref_small = reference_forward(state_small, params)
    assert out_small.shape == (8, action_dim)
    assert jnp.allclose(out_small, ref_small, atol=5e-2, rtol=5e-2), "mismatch (batch=8)"

    print("KERNEL_OK")
</pallas_src>

<mosaic_0001>
module attributes {stable_mosaic.version = 11 : i64} {
  func.func @kernel(%arg0: i32, %arg1: memref<128x128xbf16, #tpu.memory_space<vmem>>, %arg2: memref<128x512xbf16, #tpu.memory_space<vmem>>, %arg3: memref<512x256xbf16, #tpu.memory_space<vmem>>, %arg4: memref<512x128xbf16, #tpu.memory_space<vmem>>, %arg5: memref<5x512xf32, #tpu.memory_space<vmem>>, %arg6: memref<128x8xf32, #tpu.memory_space<vmem>>) attributes {dimension_semantics = [#tpu.dimension_semantics<parallel>], iteration_bounds = array<i64: 2>, scalar_prefetch = 0 : i64, scratch_operands = 0 : i64, tpu.core_type = #tpu.core_type<tc>, window_params = [{transform_indices = @transform_0, window_bounds = array<i64: 128, 128>}, {pipeline_mode = #tpu.pipeline_mode<synchronous>, transform_indices = @transform_1, window_bounds = array<i64: 128, 512>}, {pipeline_mode = #tpu.pipeline_mode<synchronous>, transform_indices = @transform_2, window_bounds = array<i64: 512, 256>}, {pipeline_mode = #tpu.pipeline_mode<synchronous>, transform_indices = @transform_3, window_bounds = array<i64: 512, 128>}, {pipeline_mode = #tpu.pipeline_mode<synchronous>, transform_indices = @transform_4, window_bounds = array<i64: 5, 512>}, {transform_indices = @transform_5, window_bounds = array<i64: 128, 8>}]} {
    %c0 = arith.constant 0 : index
    %c0_0 = arith.constant 0 : index
    %0 = vector.load %arg1[%c0, %c0_0] : memref<128x128xbf16, #tpu.memory_space<vmem>>, vector<128x128xbf16>
    %c0_1 = arith.constant 0 : index
    %c0_2 = arith.constant 0 : index
    %1 = vector.load %arg2[%c0_1, %c0_2] : memref<128x512xbf16, #tpu.memory_space<vmem>>, vector<128x512xbf16>
    %c0_3 = arith.constant 0 : index
    %c0_4 = arith.constant 0 : index
    %2 = vector.load %arg5[%c0_3, %c0_4] : memref<5x512xf32, #tpu.memory_space<vmem>>, vector<1x512xf32>
    %cst = arith.constant dense<0.000000e+00> : vector<128x512xf32>
    %3 = tpu.matmul %0, %1, %cst {dimension_numbers = #tpu.dot_dimension_numbers<[1], [0], [0], [1], [0, 0, 1, 1], [], []>} : vector<128x128xbf16>, vector<128x512xbf16>, vector<128x512xf32> -> vector<128x512xf32>
    %4 = vector.broadcast %2 : vector<1x512xf32> to vector<128x512xf32>
    %5 = arith.addf %3, %4 : vector<128x512xf32>
    %cst_5 = arith.constant 0.000000e+00 : f32
    %6 = vector.broadcast %cst_5 : f32 to vector<128x512xf32>
    %7 = arith.maximumf %5, %6 : vector<128x512xf32>
    %8 = arith.truncf %7 : vector<128x512xf32> to vector<128x512xbf16>
    %c0_6 = arith.constant 0 : index
    %c0_7 = arith.constant 0 : index
    %9 = vector.load %arg3[%c0_6, %c0_7] : memref<512x256xbf16, #tpu.memory_space<vmem>>, vector<512x256xbf16>
    %c1 = arith.constant 1 : index
    %c0_8 = arith.constant 0 : index
    %10 = vector.load %arg5[%c1, %c0_8] : memref<5x512xf32, #tpu.memory_space<vmem>>, vector<1x256xf32>
    %cst_9 = arith.constant dense<0.000000e+00> : vector<128x256xf32>
    %11 = tpu.matmul %8, %9, %cst_9 {dimension_numbers = #tpu.dot_dimension_numbers<[1], [0], [0], [1], [0, 0, 1, 1], [], []>} : vector<128x512xbf16>, vector<512x256xbf16>, vector<128x256xf32> -> vector<128x256xf32>
    %12 = vector.broadcast %10 : vector<1x256xf32> to vector<128x256xf32>
    %13 = arith.addf %11, %12 : vector<128x256xf32>
    %cst_10 = arith.constant 0.000000e+00 : f32
    %14 = vector.broadcast %cst_10 : f32 to vector<128x256xf32>
    %15 = arith.maximumf %13, %14 : vector<128x256xf32>
    %16 = arith.truncf %15 : vector<128x256xf32> to vector<128x256xbf16>
    %c0_11 = arith.constant 0 : index
    %c0_12 = arith.constant 0 : index
    %17 = vector.load %arg4[%c0_11, %c0_12] : memref<512x128xbf16, #tpu.memory_space<vmem>>, vector<256x128xbf16>
    %c2 = arith.constant 2 : index
    %c0_13 = arith.constant 0 : index
    %18 = vector.load %arg5[%c2, %c0_13] : memref<5x512xf32, #tpu.memory_space<vmem>>, vector<1x128xf32>
    %cst_14 = arith.constant dense<0.000000e+00> : vector<128x128xf32>
    %19 = tpu.matmul %16, %17, %cst_14 {dimension_numbers = #tpu.dot_dimension_numbers<[1], [0], [0], [1], [0, 0, 1, 1], [], []>} : vector<128x256xbf16>, vector<256x128xbf16>, vector<128x128xf32> -> vector<128x128xf32>
    %20 = vector.broadcast %18 : vector<1x128xf32> to vector<128x128xf32>
    %21 = arith.addf %19, %20 : vector<128x128xf32>
    %cst_15 = arith.constant 0.000000e+00 : f32
    %22 = vector.broadcast %cst_15 : f32 to vector<128x128xf32>
    %23 = arith.maximumf %21, %22 : vector<128x128xf32>
    %24 = arith.truncf %23 : vector<128x128xf32> to vector<128x128xbf16>
    %c256 = arith.constant 256 : index
    %c0_16 = arith.constant 0 : index
    %25 = vector.load %arg4[%c256, %c0_16] : memref<512x128xbf16, #tpu.memory_space<vmem>>, vector<128x128xbf16>
    %c3 = arith.constant 3 : index
    %c0_17 = arith.constant 0 : index
    %26 = vector.load %arg5[%c3, %c0_17] : memref<5x512xf32, #tpu.memory_space<vmem>>, vector<1x128xf32>
    %cst_18 = arith.constant dense<0.000000e+00> : vector<128x128xf32>
    %27 = tpu.matmul %24, %25, %cst_18 {dimension_numbers = #tpu.dot_dimension_numbers<[1], [0], [0], [1], [0, 0, 1, 1], [], []>} : vector<128x128xbf16>, vector<128x128xbf16>, vector<128x128xf32> -> vector<128x128xf32>
    %28 = vector.broadcast %26 : vector<1x128xf32> to vector<128x128xf32>
    %29 = arith.addf %27, %28 : vector<128x128xf32>
    %cst_19 = arith.constant 0.000000e+00 : f32
    %30 = vector.broadcast %cst_19 : f32 to vector<128x128xf32>
    %31 = arith.maximumf %29, %30 : vector<128x128xf32>
    %32 = arith.truncf %31 : vector<128x128xf32> to vector<128x128xbf16>
    %c384 = arith.constant 384 : index
    %c0_20 = arith.constant 0 : index
    %33 = vector.load %arg4[%c384, %c0_20] : memref<512x128xbf16, #tpu.memory_space<vmem>>, vector<128x128xbf16>
    %c4 = arith.constant 4 : index
    %c0_21 = arith.constant 0 : index
    %34 = vector.load %arg5[%c4, %c0_21] : memref<5x512xf32, #tpu.memory_space<vmem>>, vector<1x128xf32>
    %cst_22 = arith.constant dense<0.000000e+00> : vector<128x128xf32>
    %35 = tpu.matmul %32, %33, %cst_22 {dimension_numbers = #tpu.dot_dimension_numbers<[1], [0], [0], [1], [0, 0, 1, 1], [], []>} : vector<128x128xbf16>, vector<128x128xbf16>, vector<128x128xf32> -> vector<128x128xf32>
    %36 = vector.broadcast %34 : vector<1x128xf32> to vector<128x128xf32>
    %37 = arith.addf %35, %36 : vector<128x128xf32>
    %38 = vector.extract_strided_slice %37 {offsets = [0, 0], sizes = [128, 8], strides = [1, 1]} : vector<128x128xf32> to vector<128x8xf32>
    %c0_23 = arith.constant 0 : index
    %c0_24 = arith.constant 0 : index
    %39 = vector.load %arg6[%c0_23, %c0_24] : memref<128x8xf32, #tpu.memory_space<vmem>>, vector<128x8xf32>
    tpu.vector_store %arg6[%c0_23, %c0_24], %38 {strides = array<i32>} : memref<128x8xf32, #tpu.memory_space<vmem>>, vector<128x8xf32>,
    return
  }
  func.func @transform_0(%arg0: i32) -> (i32, i32) {
    %c0_i32 = arith.constant 0 : i32
    %c0_i32_0 = arith.constant 0 : i32
    return %arg0, %c0_i32 : i32, i32
  }
  func.func @transform_1(%arg0: i32) -> (i32, i32) {
    %c0_i32 = arith.constant 0 : i32
    %c0_i32_0 = arith.constant 0 : i32
    %c0_i32_1 = arith.constant 0 : i32
    return %c0_i32, %c0_i32_0 : i32, i32
  }
  func.func @transform_2(%arg0: i32) -> (i32, i32) {
    %c0_i32 = arith.constant 0 : i32
    %c0_i32_0 = arith.constant 0 : i32
    %c0_i32_1 = arith.constant 0 : i32
    return %c0_i32, %c0_i32_0 : i32, i32
  }
  func.func @transform_3(%arg0: i32) -> (i32, i32) {
    %c0_i32 = arith.constant 0 : i32
    %c0_i32_0 = arith.constant 0 : i32
    %c0_i32_1 = arith.constant 0 : i32
    return %c0_i32, %c0_i32_0 : i32, i32
  }
  func.func @transform_4(%arg0: i32) -> (i32, i32) {
    %c0_i32 = arith.constant 0 : i32
    %c0_i32_0 = arith.constant 0 : i32
    %c0_i32_1 = arith.constant 0 : i32
    return %c0_i32, %c0_i32_0 : i32, i32
  }
  func.func @transform_5(%arg0: i32) -> (i32, i32) {
    %c0_i32 = arith.constant 0 : i32
    %c0_i32_0 = arith.constant 0 : i32
    return %arg0, %c0_i32 : i32, i32
  }
}

</mosaic_0001>

<llo_original>
// kernel: tpu_custom_call.1
$region0: #{tpu_custom_call.1}
  #allocation0 [shape = 'u32[]', space=smem, size = 0x4, offset = 0x4, fixed_abs, tag = 'smem constant byte address 0x4 - core index']
  #allocation1 [shape = 'u32[144,128]{1,0:T(1,128)}', space=vmem, size = 0x12000, scoped, tag = 'internal scratch']
  %s0 = inlined_call_operand.hbm [shape: bf16[256,128], index: 0, kind: input, shape index: {}]
  %s1 = inlined_call_operand.hbm [shape: bf16[128,512], index: 1, kind: input, shape index: {}]
  %s2 = inlined_call_operand.hbm [shape: bf16[512,256], index: 2, kind: input, shape index: {}]
  %s3 = inlined_call_operand.hbm [shape: bf16[512,128], index: 3, kind: input, shape index: {}]
  %s4 = inlined_call_operand.hbm [shape: f32[5,512], index: 4, kind: input, shape index: {}]
  %s5 = inlined_call_operand.vmem [shape: f32[256,8], index: 5, kind: output, shape index: {}]
  %s6 = sld [smem:[#allocation0]]
  $region73: #{tpu_custom_call.1} parent=0
    _
  %s8 = ssub.s32 1, %s6
  %s9 = scalar_select 0, %s8, %s6
  $region1: #{tpu_custom_call.1} parent=0
    #allocation2 [shape = 'u8[65536]{0}', space=vmem, size = 0x10000, scoped, tag = 'input window, operand 0']
    #allocation3 [shape = 's32[2]{0}', space=sflag, size = 0x8, scoped, tag = 'scoped memory for tpu_custom_call.1']
    #allocation4 [shape = 'u8[131072]{0}', space=vmem, size = 0x20000, scoped, tag = 'input window, operand 1, single buffered']
    #allocation5 [shape = 's32[1]{0}', space=sflag, size = 0x4, scoped, tag = 'scoped memory for tpu_custom_call.1']
    #allocation6 [shape = 'u8[262144]{0}', space=vmem, size = 0x40000, scoped, tag = 'input window, operand 2, single buffered']
    #allocation7 [shape = 'u8[131072]{0}', space=vmem, size = 0x20000, scoped, tag = 'input window, operand 3, single buffered']
    #allocation8 [shape = 's32[1]{0}', space=sflag, size = 0x4, scoped, tag = 'scoped memory for tpu_custom_call.1']
    #allocation9 [shape = 'u8[16384]{0}', space=vmem, size = 0x4000, scoped, tag = 'input window, operand 4, single buffered']
    %10 = vsyncpa [#allocation3], 0
    %s11 = scalar_lea.sflag [#allocation3], 1
    %12 = vsyncpa %s11, 0
    %13 = vsyncpa [#allocation5], 0
    %14 = vsyncpa [#allocation8], 0
    loop: start=0, step=1, limit=4
    $region2: #{tpu_custom_call.1} parent=1 // loop_pre_header
      _
    $region3: #{tpu_custom_call.1} parent=1 // loop_header
      %s16 = sphi 0, %s20
      %p17 = scmp.ge.s32.totalorder %s16, 4
      %s26 = sphi 0, %s28
      %s29 = sphi 0, %s26
      %s30 = sphi 0, %s29
      %s46 = sphi 0, %s30
      %s50 = sphi 0, %s50
      %s52 = sphi 0, %s50
      %s53 = sphi 0, %s52
      %s67 = sphi 0, %s53
      %s71 = sphi 0, %s71
      %s73 = sphi 0, %s71
      %s74 = sphi 0, %s73
      %s88 = sphi 0, %s74
      %s92 = sphi 0, %s92
      %s94 = sphi 0, %s92
      %s95 = sphi 0, %s94
      %s109 = sphi 0, %s95
      %s113 = sphi 0, %s113
      %s115 = sphi 0, %s113
      %s116 = sphi 0, %s115
      %s130 = sphi 0, %s116
      %s136 = sphi 0, %s138
      %s139 = sphi 0, %s136
      %s140 = sphi 0, %s139
      %s156 = sphi 0, %s140
    $region4: #{tpu_custom_call.1} parent=1 // loop_header_branch
      %19 = sbr.rel (%p17) target = $region8
    $region5: #{tpu_custom_call.1} parent=1 // loop_body
      %s21 = ssub.s32 %s16, 1
      %s22 = ssub.s32 %s16, 2
      %s23 = sadd.s32 %s16, 1
      %s24 = ssub.s32 %s16, %s23
      %p25 = scmp.eq.s32.totalorder %s24, 0
      %s27 = sadd.s32 %s26, 1
      %s28 = scalar_select %p25, %s26, %s27
      %p31 = pneg %p25
      %p32 = scmp.eq.s32.totalorder %s16, 1
      %p33 = por %p31, %p32
      %p34 = scmp.ne.s32.totalorder %s26, %s29
      %p35 = scmp.eq.s32.totalorder %s16, 0
      %p36 = por %p34, %p35
      %p37 = scmp.ne.s32.totalorder %s26, %s29
      %p38 = scmp.eq.s32.totalorder %s21, 1
      %p39 = por %p37, %p38
      %p40 = scmp.ne.s32.totalorder %s29, %s30
      %p41 = scmp.eq.s32.totalorder %s21, 0
      %p42 = por %p40, %p41
      %p43 = scmp.ne.s32.totalorder %s29, %s30
      %p44 = scmp.eq.s32.totalorder %s22, 1
      %p45 = por %p43, %p44
      %p47 = scmp.ne.s32.totalorder %s30, %s46
      %p48 = scmp.eq.s32.totalorder %s22, 0
      %p49 = por %p47, %p48
      %s51 = sadd.s32 %s50, 1
      %p54 = scmp.eq.s32.totalorder %s16, 1
      %p55 = scmp.ne.s32.totalorder %s50, %s52
      %p56 = scmp.eq.s32.totalorder %s16, 0
      %p57 = por %p55, %p56
      %p58 = scmp.ne.s32.totalorder %s50, %s52
      %p59 = scmp.eq.s32.totalorder %s21, 1
      %p60 = por %p58, %p59
      %p61 = scmp.ne.s32.totalorder %s52, %s53
      %p62 = scmp.eq.s32.totalorder %s21, 0
      %p63 = por %p61, %p62
      %p64 = scmp.ne.s32.totalorder %s52, %s53
      %p65 = scmp.eq.s32.totalorder %s22, 1
      %p66 = por %p64, %p65
      %p68 = scmp.ne.s32.totalorder %s53, %s67
      %p69 = scmp.eq.s32.totalorder %s22, 0
      %p70 = por %p68, %p69
      %s72 = sadd.s32 %s71, 1
      %p75 = scmp.eq.s32.totalorder %s16, 1
      %p76 = scmp.ne.s32.totalorder %s71, %s73
      %p77 = scmp.eq.s32.totalorder %s16, 0
      %p78 = por %p76, %p77
      %p79 = scmp.ne.s32.totalorder %s71, %s73
      %p80 = scmp.eq.s32.totalorder %s21, 1
      %p81 = por %p79, %p80
      %p82 = scmp.ne.s32.totalorder %s73, %s74
      %p83 = scmp.eq.s32.totalorder %s21, 0
      %p84 = por %p82, %p83
      %p85 = scmp.ne.s32.totalorder %s73, %s74
      %p86 = scmp.eq.s32.totalorder %s22, 1
      %p87 = por %p85, %p86
      %p89 = scmp.ne.s32.totalorder %s74, %s88
      %p90 = scmp.eq.s32.totalorder %s22, 0
      %p91 = por %p89, %p90
      %s93 = sadd.s32 %s92, 1
      %p96 = scmp.eq.s32.totalorder %s16, 1
      %p97 = scmp.ne.s32.totalorder %s92, %s94
      %p98 = scmp.eq.s32.totalorder %s16, 0
      %p99 = por %p97, %p98
      %p100 = scmp.ne.s32.totalorder %s92, %s94
      %p101 = scmp.eq.s32.totalorder %s21, 1
      %p102 = por %p100, %p101
      %p103 = scmp.ne.s32.totalorder %s94, %s95
      %p104 = scmp.eq.s32.totalorder %s21, 0
      %p105 = por %p103, %p104
      %p106 = scmp.ne.s32.totalorder %s94, %s95
      %p107 = scmp.eq.s32.totalorder %s22, 1
      %p108 = por %p106, %p107
      %p110 = scmp.ne.s32.totalorder %s95, %s109
      %p111 = scmp.eq.s32.totalorder %s22, 0
      %p112 = por %p110, %p111
      %s114 = sadd.s32 %s113, 1
      %p117 = scmp.eq.s32.totalorder %s16, 1
      %p118 = scmp.ne.s32.totalorder %s113, %s115
      %p119 = scmp.eq.s32.totalorder %s16, 0
      %p120 = por %p118, %p119
      %p121 = scmp.ne.s32.totalorder %s113, %s115
      %p122 = scmp.eq.s32.totalorder %s21, 1
      %p123 = por %p121, %p122
      %p124 = scmp.ne.s32.totalorder %s115, %s116
      %p125 = scmp.eq.s32.totalorder %s21, 0
      %p126 = por %p124, %p125
      %p127 = scmp.ne.s32.totalorder %s115, %s116
      %p128 = scmp.eq.s32.totalorder %s22, 1
      %p129 = por %p127, %p128
      %p131 = scmp.ne.s32.totalorder %s116, %s130
      %p132 = scmp.eq.s32.totalorder %s22, 0
      %p133 = por %p131, %p132
      %s134 = ssub.s32 %s16, %s23
      %p135 = scmp.eq.s32.totalorder %s134, 0
      %s137 = sadd.s32 %s136, 1
      %s138 = scalar_select %p135, %s136, %s137
      %p141 = pneg %p135
      %p142 = scmp.eq.s32.totalorder %s16, 1
      %p143 = por %p141, %p142
      %p144 = scmp.ne.s32.totalorder %s136, %s139
      %p145 = scmp.eq.s32.totalorder %s16, 0
      %p146 = por %p144, %p145
      %p147 = scmp.ne.s32.totalorder %s136, %s139
      %p148 = scmp.eq.s32.totalorder %s21, 1
      %p149 = por %p147, %p148
      %p150 = scmp.ne.s32.totalorder %s139, %s140
      %p151 = scmp.eq.s32.totalorder %s21, 0
      %p152 = por %p150, %p151
      %p153 = scmp.ne.s32.totalorder %s139, %s140
      %p154 = scmp.eq.s32.totalorder %s22, 1
      %p155 = por %p153, %p154
      %p157 = scmp.ne.s32.totalorder %s140, %s156
      %p158 = scmp.eq.s32.totalorder %s22, 0
      %p159 = por %p157, %p158
      %p160 = scmp.le.s32.totalorder 1, %s16
      %p161 = scmp.lt.s32.totalorder %s16, 3
      %p162 = pnand %p160, %p161
      %p163 = pneg %p162
      // Predicated region
      $region9: #{tpu_custom_call.1} parent=5 // pred_check
        _
      $region10: #{tpu_custom_call.1} parent=5 // pred_check_branch
        %165 = sbr.rel (%p162) target = $region12
      $region11: #{tpu_custom_call.1} parent=5 // pred_region
        %s166 = ssub.s32 %s16, 1
        // Predicated region
        $region13: #{tpu_custom_call.1} parent=11 // pred_check
          %p167 = pneg %p63
        $region14: #{tpu_custom_call.1} parent=11 // pred_check_branch
          %169 = sbr.rel (%p167) target = $region16
        $region15: #{tpu_custom_call.1} parent=11 // pred_region
          %s171 = ssub.s32 4096, 4096
          %172 = vsyncadd [#allocation5], %s171
          %s173 = sshll.u32 [#allocation4], 4
          %s174 = int_to_ptr.vmem [resolvable:$true] %s173
          %179 = dma.hbm_to_vmem [thread:$0]  %s1, 4096, %s174, [#allocation5], 256, 256, 16
        $region16: #{tpu_custom_call.1} parent=11 // pred_fallthru
          _
        // Predicated region
        $region17: #{tpu_custom_call.1} parent=11 // pred_check
          %p180 = pneg %p84
        $region18: #{tpu_custom_call.1} parent=11 // pred_check_branch
          %182 = sbr.rel (%p180) target = $region20
        $region19: #{tpu_custom_call.1} parent=11 // pred_region
          %s184 = ssub.s32 8192, 8192
          %185 = vsyncadd [#allocation5], %s184
          %s186 = sshll.u32 [#allocation6], 4
          %s187 = int_to_ptr.vmem [resolvable:$true] %s186
          %192 = dma.hbm_to_vmem [thread:$0]  %s2, 8192, %s187, [#allocation5], 128, 128, 8
        $region20: #{tpu_custom_call.1} parent=11 // pred_fallthru
          _
        // Predicated region
        $region21: #{tpu_custom_call.1} parent=11 // pred_check
          %p193 = pneg %p105
        $region22: #{tpu_custom_call.1} parent=11 // pred_check_branch
          %195 = sbr.rel (%p193) target = $region24
        $region23: #{tpu_custom_call.1} parent=11 // pred_region
          %s197 = ssub.s32 4096, 4096
          %198 = vsyncadd [#allocation8], %s197
          %s199 = sshll.u32 [#allocation7], 4
          %s200 = int_to_ptr.vmem [resolvable:$true] %s199
          %205 = dma.hbm_to_vmem [thread:$0]  %s3, 4096, %s200, [#allocation8], 64, 64, 4
        $region24: #{tpu_custom_call.1} parent=11 // pred_fallthru
          _
        // Predicated region
        $region25: #{tpu_custom_call.1} parent=11 // pred_check
          %p206 = pneg %p126
        $region26: #{tpu_custom_call.1} parent=11 // pred_check_branch
          %208 = sbr.rel (%p206) target = $region28
        $region27: #{tpu_custom_call.1} parent=11 // pred_region
          %s210 = ssub.s32 512, 512
          %211 = vsyncadd [#allocation8], %s210
          %s213 = sshll.u32 [#allocation9], 4
          %s214 = int_to_ptr.vmem [resolvable:$true] %s213
          %216 = dma.hbm_to_vmem [thread:$0]  %s4, 512, %s214, [#allocation8]
        $region28: #{tpu_custom_call.1} parent=11 // pred_fallthru
          _
      $region12: #{tpu_custom_call.1} parent=5 // pred_fallthru
        _
      %p217 = scmp.lt.s32.totalorder %s16, 2
      // Predicated region
      $region29: #{tpu_custom_call.1} parent=5 // pred_check
        %p218 = pneg %p217
      $region30: #{tpu_custom_call.1} parent=5 // pred_check_branch
        %220 = sbr.rel (%p218) target = $region32
      $region31: #{tpu_custom_call.1} parent=5 // pred_region
        // Predicated region
        $region33: #{tpu_custom_call.1} parent=31 // pred_check
          %p221 = pneg %p36
        $region34: #{tpu_custom_call.1} parent=31 // pred_check_branch
          %223 = sbr.rel (%p221) target = $region36
        $region35: #{tpu_custom_call.1} parent=31 // pred_region
          %s224 = sand.u32 %s26, 1
          %s225 = scalar_lea.sflag [#allocation3], %s224
          %s226 = sand.u32 %s26, 1
          %s227 = smul.addr %s226, 64
          %s228 = scalar_lea.vmem [#allocation2], %s227
          %s229 = smul.u32 16, %s16
          %s231 = ssub.s32 1024, 1024
          %232 = vsyncadd %s225, %s231
          %s233 = smul.addr %s229, 64
          %s234 = scalar_lea.hbm %s0, %s233
          %s235 = sshll.u32 %s228, 4
          %s236 = int_to_ptr.vmem [resolvable:$true] %s235
          %241 = dma.hbm_to_vmem [thread:$0]  %s234, 1024, %s236, %s225, 64, 64, 4
        $region36: #{tpu_custom_call.1} parent=31 // pred_fallthru
          _
      $region32: #{tpu_custom_call.1} parent=5 // pred_fallthru
        _
      %p242 = scmp.le.s32.totalorder 1, %s16
      %p243 = scmp.lt.s32.totalorder %s16, 3
      %p244 = pnand %p242, %p243
      %p245 = pneg %p244
      // Predicated region
      $region37: #{tpu_custom_call.1} parent=5 // pred_check
        _
      $region38: #{tpu_custom_call.1} parent=5 // pred_check_branch
        %247 = sbr.rel (%p244) target = $region40
      $region39: #{tpu_custom_call.1} parent=5 // pred_region
        %s248 = ssub.s32 %s16, 1
        %s249 = sand.u32 %s29, 1
        %s250 = scalar_lea.sflag [#allocation3], %s249
        %s251 = sand.u32 %s29, 1
        %s252 = smul.addr %s251, 64
        %s253 = scalar_lea.vmem [#allocation2], %s252
        // Predicated region
        $region41: #{tpu_custom_call.1} parent=39 // pred_check
          %p254 = pneg %p42
        $region42: #{tpu_custom_call.1} parent=39 // pred_check_branch
          %256 = sbr.rel (%p254) target = $region44
        $region43: #{tpu_custom_call.1} parent=39 // pred_region
          %257 = dma.done %s250, 1024
        $region44: #{tpu_custom_call.1} parent=39 // pred_fallthru
          _
        // Predicated region
        $region45: #{tpu_custom_call.1} parent=39 // pred_check
          %p258 = pneg %p63
        $region46: #{tpu_custom_call.1} parent=39 // pred_check_branch
          %260 = sbr.rel (%p258) target = $region48
        $region47: #{tpu_custom_call.1} parent=39 // pred_region
          %261 = dma.done [#allocation5], 4096
        $region48: #{tpu_custom_call.1} parent=39 // pred_fallthru
          _
        // Predicated region
        $region49: #{tpu_custom_call.1} parent=39 // pred_check
          %p262 = pneg %p84
        $region50: #{tpu_custom_call.1} parent=39 // pred_check_branch
          %264 = sbr.rel (%p262) target = $region52
        $region51: #{tpu_custom_call.1} parent=39 // pred_region
          %265 = dma.done [#allocation5], 8192
        $region52: #{tpu_custom_call.1} parent=39 // pred_fallthru
          _
        // Predicated region
        $region53: #{tpu_custom_call.1} parent=39 // pred_check
          %p266 = pneg %p105
        $region54: #{tpu_custom_call.1} parent=39 // pred_check_branch
          %268 = sbr.rel (%p266) target = $region56
        $region55: #{tpu_custom_call.1} parent=39 // pred_region
          %269 = dma.done [#allocation8], 4096
        $region56: #{tpu_custom_call.1} parent=39 // pred_fallthru
          _
        // Predicated region
        $region57: #{tpu_custom_call.1} parent=39 // pred_check
          %p270 = pneg %p126
        $region58: #{tpu_custom_call.1} parent=39 // pred_check_branch
          %272 = sbr.rel (%p270) target = $region60
        $region59: #{tpu_custom_call.1} parent=39 // pred_region
          %273 = dma.done [#allocation8], 512
        $region60: #{tpu_custom_call.1} parent=39 // pred_fallthru
          _
        %s274 = sand.u32 %s29, 1
        %s275 = scalar_lea.sflag [#allocation3], %s274
        %s276 = sand.u32 %s29, 1
        %s277 = smul.addr %s276, 64
        %s278 = scalar_lea.vmem [#allocation2], %s277
        %p279 = pneg %p42
        %p280 = pneg %p39
        %p281 = pneg %p63
        %p282 = pneg %p60
        %p283 = pneg %p84
        %p284 = pneg %p81
        %p285 = pneg %p105
        %p286 = pneg %p102
        %p287 = pneg %p126
        %p288 = pneg %p123
        %p289 = pneg %p152
        %p290 = pneg %p149
        %s291 = smul.u32 16, %s21
        %p292 = scmp.lt.s32.totalorder %s291, 31
        %s293 = scalar_select %p292, %s291, 31
        %s294 = smul.addr %s293, 8
        %s295 = scalar_lea.vmem %s5, %s294
        %s296 = smul.u32 16, %s21
        %s297 = smul.u32 16, %s21
        %p298 = scmp.lt.s32.totalorder %s297, 31
        %s299 = scalar_select %p298, %s297, 31
        %s300 = smul.addr %s299, 8
        %s301 = scalar_lea.vmem %s5, %s300
        %s302 = smul.u32 16, %s21
        %v304 = vld [vmem:[%s253] sm:$0xf]
        %v305 = vld [vmem:[%s253 + $0x4] sm:$0xf]
        %v306 = vld [vmem:[%s253 + $0x8] sm:$0xf]
        %v307 = vld [vmem:[%s253 + $0xc] sm:$0xf]
        %v308 = vld [vmem:[%s253 + $0x10] sm:$0xf]
        %v309 = vld [vmem:[%s253 + $0x14] sm:$0xf]
        %v310 = vld [vmem:[%s253 + $0x18] sm:$0xf]
        %v311 = vld [vmem:[%s253 + $0x1c] sm:$0xf]
        %v312 = vld [vmem:[%s253 + $0x20] sm:$0xf]
        %v313 = vld [vmem:[%s253 + $0x24] sm:$0xf]
        %v314 = vld [vmem:[%s253 + $0x28] sm:$0xf]
        %v315 = vld [vmem:[%s253 + $0x2c] sm:$0xf]
        %v316 = vld [vmem:[%s253 + $0x30] sm:$0xf]
        %v317 = vld [vmem:[%s253 + $0x34] sm:$0xf]
        %v318 = vld [vmem:[%s253 + $0x38] sm:$0xf]
        %v319 = vld [vmem:[%s253 + $0x3c] sm:$0xf]
        %v320 = vld [vmem:[#allocation4] sm:$0xff]
        %v321 = vld [vmem:[#allocation4 + $0x8] sm:$0xff]
        %v322 = vld [vmem:[#allocation4 + $0x10] sm:$0xff]
        %v323 = vld [vmem:[#allocation4 + $0x18] sm:$0xff]
        %v324 = vld [vmem:[#allocation4 + $0x20] sm:$0xff]
        %v325 = vld [vmem:[#allocation4 + $0x28] sm:$0xff]
        %v326 = vld [vmem:[#allocation4 + $0x30] sm:$0xff]
        %v327 = vld [vmem:[#allocation4 + $0x38] sm:$0xff]
        %v328 = vld [vmem:[#allocation4 + $0x40] sm:$0xff]
        %v329 = vld [vmem:[#allocation4 + $0x48] sm:$0xff]
        %v330 = vld [vmem:[#allocation4 + $0x50] sm:$0xff]
        %v331 = vld [vmem:[#allocation4 + $0x58] sm:$0xff]
        %v332 = vld [vmem:[#allocation4 + $0x60] sm:$0xff]
        %v333 = vld [vmem:[#allocation4 + $0x68] sm:$0xff]
        %v334 = vld [vmem:[#allocation4 + $0x70] sm:$0xff]
        %v335 = vld [vmem:[#allocation4 + $0x78] sm:$0xff]
        %v336 = vld [vmem:[#allocation4 + $0x80] sm:$0xff]
        %v337 = vld [vmem:[#allocation4 + $0x88] sm:$0xff]
        %v338 = vld [vmem:[#allocation4 + $0x90] sm:$0xff]
        %v339 = vld [vmem:[#allocation4 + $0x98] sm:$0xff]
        %v340 = vld [vmem:[#allocation4 + $0xa0] sm:$0xff]
        %v341 = vld [vmem:[#allocation4 + $0xa8] sm:$0xff]
        %v342 = vld [vmem:[#allocation4 + $0xb0] sm:$0xff]
        %v343 = vld [vmem:[#allocation4 + $0xb8] sm:$0xff]
        %v344 = vld [vmem:[#allocation4 + $0xc0] sm:$0xff]
        %v345 = vld [vmem:[#allocation4 + $0xc8] sm:$0xff]
        %v346 = vld [vmem:[#allocation4 + $0xd0] sm:$0xff]
        %v347 = vld [vmem:[#allocation4 + $0xd8] sm:$0xff]
        %v348 = vld [vmem:[#allocation4 + $0xe0] sm:$0xff]
        %v349 = vld [vmem:[#allocation4 + $0xe8] sm:$0xff]
        %v350 = vld [vmem:[#allocation4 + $0xf0] sm:$0xff]
        %v351 = vld [vmem:[#allocation4 + $0xf8] sm:$0xff]
        %v352 = vld [vmem:[#allocation9] ss:$8 sm:$0xf]
        %v354 = vlaneseq
        %v355 = vshrl.u32 %v354, 7
        %v356 = vsub.s32 0, %v355
        %v357 = vrot.slane %v352, %v356
        %v358 = vlaneseq
        %v359 = vshrl.u32 %v358, 7
        %v360 = vsub.s32 1, %v359
        %v361 = vrot.slane %v352, %v360
        %v362 = vlaneseq
        %v363 = vshrl.u32 %v362, 7
        %v364 = vsub.s32 2, %v363
        %v365 = vrot.slane %v352, %v364
        %v366 = vlaneseq
        %v367 = vshrl.u32 %v366, 7
        %v368 = vsub.s32 3, %v367
        %v369 = vrot.slane %v352, %v368
        %v390 = vunpack.c.l.b16 %v304
        %v391 = vunpack.c.l.b16 %v305
        %v392 = vunpack.c.l.b16 %v306
        %v393 = vunpack.c.l.b16 %v307
        %v394 = vunpack.c.l.b16 %v308
        %v395 = vunpack.c.l.b16 %v309
        %v396 = vunpack.c.l.b16 %v310
        %v397 = vunpack.c.l.b16 %v311
        %v398 = vunpack.c.l.b16 %v312
        %v399 = vunpack.c.l.b16 %v313
        %v400 = vunpack.c.l.b16 %v314
        %v401 = vunpack.c.l.b16 %v315
        %v402 = vunpack.c.l.b16 %v316
        %v403 = vunpack.c.l.b16 %v317
        %v404 = vunpack.c.l.b16 %v318
        %v405 = vunpack.c.l.b16 %v319
        %v406 = vpack.c.b16 %v391, %v390
        %v407 = vpack.c.b16 %v393, %v392
        %v408 = vpack.c.b16 %v395, %v394
        %v409 = vpack.c.b16 %v397, %v396
        %v410 = vpack.c.b16 %v399, %v398
        %v411 = vpack.c.b16 %v401, %v400
        %v412 = vpack.c.b16 %v403, %v402
        %v413 = vpack.c.b16 %v405, %v404
        %v454 = vunpack.c.l.b16 %v320
        %v455 = vunpack.c.h.b16 %v320
        %v456 = vunpack.c.l.b16 %v321
        %v457 = vunpack.c.h.b16 %v321
        %v458 = vunpack.c.l.b16 %v322
        %v459 = vunpack.c.h.b16 %v322
        %v460 = vunpack.c.l.b16 %v323
        %v461 = vunpack.c.h.b16 %v323
        %v462 = vunpack.c.l.b16 %v324
        %v463 = vunpack.c.h.b16 %v324
        %v464 = vunpack.c.l.b16 %v325
        %v465 = vunpack.c.h.b16 %v325
        %v466 = vunpack.c.l.b16 %v326
        %v467 = vunpack.c.h.b16 %v326
        %v468 = vunpack.c.l.b16 %v327
        %v469 = vunpack.c.h.b16 %v327
        %v470 = vunpack.c.l.b16 %v328
        %v471 = vunpack.c.h.b16 %v328
        %v472 = vunpack.c.l.b16 %v329
        %v473 = vunpack.c.h.b16 %v329
        %v474 = vunpack.c.l.b16 %v330
        %v475 = vunpack.c.h.b16 %v330
        %v476 = vunpack.c.l.b16 %v331
        %v477 = vunpack.c.h.b16 %v331
        %v478 = vunpack.c.l.b16 %v332
        %v479 = vunpack.c.h.b16 %v332
        %v480 = vunpack.c.l.b16 %v333
        %v481 = vunpack.c.h.b16 %v333
        %v482 = vunpack.c.l.b16 %v334
        %v483 = vunpack.c.h.b16 %v334
        %v484 = vunpack.c.l.b16 %v335
        %v485 = vunpack.c.h.b16 %v335
        %v486 = vunpack.c.l.b16 %v336
        %v487 = vunpack.c.h.b16 %v336
        %v488 = vunpack.c.l.b16 %v337
        %v489 = vunpack.c.h.b16 %v337
        %v490 = vunpack.c.l.b16 %v338
        %v491 = vunpack.c.h.b16 %v338
        %v492 = vunpack.c.l.b16 %v339
        %v493 = vunpack.c.h.b16 %v339
        %v494 = vunpack.c.l.b16 %v340
        %v495 = vunpack.c.h.b16 %v340
        %v496 = vunpack.c.l.b16 %v341
        %v497 = vunpack.c.h.b16 %v341
        %v498 = vunpack.c.l.b16 %v342
        %v499 = vunpack.c.h.b16 %v342
        %v500 = vunpack.c.l.b16 %v343
        %v501 = vunpack.c.h.b16 %v343
        %v502 = vunpack.c.l.b16 %v344
        %v503 = vunpack.c.h.b16 %v344
        %v504 = vunpack.c.l.b16 %v345
        %v505 = vunpack.c.h.b16 %v345
        %v506 = vunpack.c.l.b16 %v346
        %v507 = vunpack.c.h.b16 %v346
        %v508 = vunpack.c.l.b16 %v347
        %v509 = vunpack.c.h.b16 %v347
        %v510 = vunpack.c.l.b16 %v348
        %v511 = vunpack.c.h.b16 %v348
        %v512 = vunpack.c.l.b16 %v349
        %v513 = vunpack.c.h.b16 %v349
        %v514 = vunpack.c.l.b16 %v350
        %v515 = vunpack.c.h.b16 %v350
        %v516 = vunpack.c.l.b16 %v351
        %v517 = vunpack.c.h.b16 %v351
        %v518 = vpack.c.b16 %v458, %v454
        %v519 = vpack.c.b16 %v459, %v455
        %v520 = vpack.c.b16 %v460, %v456
        %v521 = vpack.c.b16 %v461, %v457
        %v522 = vpack.c.b16 %v466, %v462
        %v523 = vpack.c.b16 %v467, %v463
        %v524 = vpack.c.b16 %v468, %v464
        %v525 = vpack.c.b16 %v469, %v465
        %v526 = vpack.c.b16 %v474, %v470
        %v527 = vpack.c.b16 %v475, %v471
        %v528 = vpack.c.b16 %v476, %v472
        %v529 = vpack.c.b16 %v477, %v473
        %v530 = vpack.c.b16 %v482, %v478
        %v531 = vpack.c.b16 %v483, %v479
        %v532 = vpack.c.b16 %v484, %v480
        %v533 = vpack.c.b16 %v485, %v481
        %v534 = vpack.c.b16 %v490, %v486
        %v535 = vpack.c.b16 %v491, %v487
        %v536 = vpack.c.b16 %v492, %v488
        %v537 = vpack.c.b16 %v493, %v489
        %v538 = vpack.c.b16 %v498, %v494
        %v539 = vpack.c.b16 %v499, %v495
        %v540 = vpack.c.b16 %v500, %v496
        %v541 = vpack.c.b16 %v501, %v497
        %v542 = vpack.c.b16 %v506, %v502
        %v543 = vpack.c.b16 %v507, %v503
        %v544 = vpack.c.b16 %v508, %v504
        %v545 = vpack.c.b16 %v509, %v505
        %v546 = vpack.c.b16 %v514, %v510
        %v547 = vpack.c.b16 %v515, %v511
        %v548 = vpack.c.b16 %v516, %v512
        %v549 = vpack.c.b16 %v517, %v513
        %582 = vmatprep.subr.bf16.mxu0 %v519
        %583 = vmatpush1.bf16.msra.mxu0 %v518
        %584 = vmatprep.subr.bf16.mxu0 %v523
        %585 = vmatpush1.bf16.msra.mxu0 %v522
        %586 = vmatprep.subr.bf16.mxu0 %v527
        %587 = vmatpush1.bf16.msra.mxu0 %v526
        %588 = vmatprep.subr.bf16.mxu0 %v531
        %589 = vmatpush1.bf16.msra.mxu0 %v530
        %590 = vmatprep.subr.bf16.mxu0 %v535
        %591 = vmatpush1.bf16.msra.mxu0 %v534
        %592 = vmatprep.subr.bf16.mxu0 %v539
        %593 = vmatpush1.bf16.msra.mxu0 %v538
        %594 = vmatprep.subr.bf16.mxu0 %v543
        %595 = vmatpush1.bf16.msra.mxu0 %v542
        %596 = vmatprep.subr.bf16.mxu0 %v547
        %597 = vmatpush1.bf16.msra.mxu0 %v546
        %598 = vmatprep.subr.bf16.mxu0 0
        %599 = vmatpush1.bf16.msra.mxu0 0
        %600 = vmatprep.subr.bf16.mxu0 0
        %601 = vmatpush1.bf16.msra.mxu0 0
        %602 = vmatprep.subr.bf16.mxu0 0
        %603 = vmatpush1.bf16.msra.mxu0 0
        %604 = vmatprep.subr.bf16.mxu0 0
        %605 = vmatpush1.bf16.msra.mxu0 0
        %606 = vmatprep.subr.bf16.mxu0 0
        %607 = vmatpush1.bf16.msra.mxu0 0
        %608 = vmatprep.subr.bf16.mxu0 0
        %609 = vmatpush1.bf16.msra.mxu0 0
        %610 = vmatprep.subr.bf16.mxu0 0
        %611 = vmatpush1.bf16.msra.mxu0 0
        %612 = vmatprep.subr.bf16.mxu0 0
        %613 = vmatpush1.bf16.msra.mxu0 0
        %614 = vmatprep.mubr.bf16.mxu0 0
        %615 = vmatmul.mubr.bf16.gmra.mrb[0].mxu0 %v406
        %v616 = vpop.f32.mrb[0].mxu0
        %v617 = vadd.f32 %v357, %v616
        %v618 = vpop.f32.mrb[0].mxu0
        %v619 = vadd.f32 %v361, %v618
        %v620 = vpop.f32.mrb[0].mxu0
        %v621 = vadd.f32 %v357, %v620
        %v622 = vpop.f32.mrb[0].mxu0
        %v623 = vadd.f32 %v361, %v622
        %624 = vmatprep.mubr.bf16.mxu0 0
        %625 = vmatmul.mubr.bf16.gmra.mrb[0].mxu0 %v407
        %v626 = vpop.f32.mrb[0].mxu0
        %v627 = vadd.f32 %v357, %v626
        %v628 = vpop.f32.mrb[0].mxu0
        %v629 = vadd.f32 %v361, %v628
        %v630 = vpop.f32.mrb[0].mxu0
        %v631 = vadd.f32 %v357, %v630
        %v632 = vpop.f32.mrb[0].mxu0
        %v633 = vadd.f32 %v361, %v632
        %634 = vmatprep.mubr.bf16.mxu0 0
        %635 = vmatmul.mubr.bf16.gmra.mrb[0].mxu0 %v408
        %v636 = vpop.f32.mrb[0].mxu0
        %v637 = vadd.f32 %v357, %v636
        %v638 = vpop.f32.mrb[0].mxu0
        %v639 = vadd.f32 %v361, %v638
        %v640 = vpop.f32.mrb[0].mxu0
        %v641 = vadd.f32 %v357, %v640
        %v642 = vpop.f32.mrb[0].mxu0
        %v643 = vadd.f32 %v361, %v642
        %644 = vmatprep.mubr.bf16.mxu0 0
        %645 = vmatmul.mubr.bf16.gmra.mrb[0].mxu0 %v409
        %v646 = vpop.f32.mrb[0].mxu0
        %v647 = vadd.f32 %v357, %v646
        %v648 = vpop.f32.mrb[0].mxu0
        %v649 = vadd.f32 %v361, %v648
        %v650 = vpop.f32.mrb[0].mxu0
        %v651 = vadd.f32 %v357, %v650
        %v652 = vpop.f32.mrb[0].mxu0
        %v653 = vadd.f32 %v361, %v652
        %654 = vmatprep.mubr.bf16.mxu0 0
        %655 = vmatmul.mubr.bf16.gmra.mrb[0].mxu0 %v410
        %v656 = vpop.f32.mrb[0].mxu0
        %v657 = vadd.f32 %v357, %v656
        %v658 = vpop.f32.mrb[0].mxu0
        %v659 = vadd.f32 %v361, %v658
        %v660 = vpop.f32.mrb[0].mxu0
        %v661 = vadd.f32 %v357, %v660
        %v662 = vpop.f32.mrb[0].mxu0
        %v663 = vadd.f32 %v361, %v662
        %664 = vmatprep.mubr.bf16.mxu0 0
        %665 = vmatmul.mubr.bf16.gmra.mrb[0].mxu0 %v411
        %v666 = vpop.f32.mrb[0].mxu0
        %v667 = vadd.f32 %v357, %v666
        %v668 = vpop.f32.mrb[0].mxu0
        %v669 = vadd.f32 %v361, %v668
        %v670 = vpop.f32.mrb[0].mxu0
        %v671 = vadd.f32 %v357, %v670
        %v672 = vpop.f32.mrb[0].mxu0
        %v673 = vadd.f32 %v361, %v672
        %674 = vmatprep.mubr.bf16.mxu0 0
        %675 = vmatmul.mubr.bf16.gmra.mrb[0].mxu0 %v412
        %v676 = vpop.f32.mrb[0].mxu0
        %v677 = vadd.f32 %v357, %v676
        %v678 = vpop.f32.mrb[0].mxu0
        %v679 = vadd.f32 %v361, %v678
        %v680 = vpop.f32.mrb[0].mxu0
        %v681 = vadd.f32 %v357, %v680
        %v682 = vpop.f32.mrb[0].mxu0
        %v683 = vadd.f32 %v361, %v682
        %684 = vmatprep.mubr.bf16.mxu0 0
        %685 = vmatmul.mubr.bf16.gmra.mrb[0].mxu0 %v413
        %v686 = vpop.f32.mrb[0].mxu0
        %v687 = vadd.f32 %v357, %v686
        %v688 = vpop.f32.mrb[0].mxu0
        %v689 = vadd.f32 %v361, %v688
        %v690 = vpop.f32.mrb[0].mxu0
        %v691 = vadd.f32 %v357, %v690
        %v692 = vpop.f32.mrb[0].mxu0
        %v693 = vadd.f32 %v361, %v692
        %694 = vdwg.mxu0
        %695 = vmatprep.subr.bf16.mxu0 %v521
        %696 = vmatpush1.bf16.msra.mxu0 %v520
        %697 = vmatprep.subr.bf16.mxu0 %v525
        %698 = vmatpush1.bf16.msra.mxu0 %v524
        %699 = vmatprep.subr.bf16.mxu0 %v529
        %700 = vmatpush1.bf16.msra.mxu0 %v528
        %701 = vmatprep.subr.bf16.mxu0 %v533
        %702 = vmatpush1.bf16.msra.mxu0 %v532
        %703 = vmatprep.subr.bf16.mxu0 %v537
        %704 = vmatpush1.bf16.msra.mxu0 %v536
        %705 = vmatprep.subr.bf16.mxu0 %v541
        %706 = vmatpush1.bf16.msra.mxu0 %v540
        %707 = vmatprep.subr.bf16.mxu0 %v545
        %708 = vmatpush1.bf16.msra.mxu0 %v544
        %709 = vmatprep.subr.bf16.mxu0 %v549
        %710 = vmatpush1.bf16.msra.mxu0 %v548
        %711 = vmatprep.subr.bf16.mxu0 0
        %712 = vmatpush1.bf16.msra.mxu0 0
        %713 = vmatprep.subr.bf16.mxu0 0
        %714 = vmatpush1.bf16.msra.mxu0 0
        %715 = vmatprep.subr.bf16.mxu0 0
        %716 = vmatpush1.bf16.msra.mxu0 0
        %717 = vmatprep.subr.bf16.mxu0 0
        %718 = vmatpush1.bf16.msra.mxu0 0
        %719 = vmatprep.subr.bf16.mxu0 0
        %720 = vmatpush1.bf16.msra.mxu0 0
        %721 = vmatprep.subr.bf16.mxu0 0
        %722 = vmatpush1.bf16.msra.mxu0 0
        %723 = vmatprep.subr.bf16.mxu0 0
        %724 = vmatpush1.bf16.msra.mxu0 0
        %725 = vmatprep.subr.bf16.mxu0 0
        %726 = vmatpush1.bf16.msra.mxu0 0
        %727 = vmatprep.mubr.bf16.mxu0 0
        %728 = vmatmul.mubr.bf16.gmra.mrb[0].mxu0 %v406
        %v729 = vpop.f32.mrb[0].mxu0
        %v730 = vadd.f32 %v365, %v729
        %v731 = vpop.f32.mrb[0].mxu0
        %v732 = vadd.f32 %v369, %v731
        %v733 = vpop.f32.mrb[0].mxu0
        %v734 = vadd.f32 %v365, %v733
        %v735 = vpop.f32.mrb[0].mxu0
        %v736 = vadd.f32 %v369, %v735
        %737 = vmatprep.mubr.bf16.mxu0 0
        %738 = vmatmul.mubr.bf16.gmra.mrb[0].mxu0 %v407
        %v739 = vpop.f32.mrb[0].mxu0
        %v740 = vadd.f32 %v365, %v739
        %v741 = vpop.f32.mrb[0].mxu0
        %v742 = vadd.f32 %v369, %v741
        %v743 = vpop.f32.mrb[0].mxu0
        %v744 = vadd.f32 %v365, %v743
        %v745 = vpop.f32.mrb[0].mxu0
        %v746 = vadd.f32 %v369, %v745
        %747 = vmatprep.mubr.bf16.mxu0 0
        %748 = vmatmul.mubr.bf16.gmra.mrb[0].mxu0 %v408
        %v749 = vpop.f32.mrb[0].mxu0
        %v750 = vadd.f32 %v365, %v749
        %v751 = vpop.f32.mrb[0].mxu0
        %v752 = vadd.f32 %v369, %v751
        %v753 = vpop.f32.mrb[0].mxu0
        %v754 = vadd.f32 %v365, %v753
        %v755 = vpop.f32.mrb[0].mxu0
        %v756 = vadd.f32 %v369, %v755
        %757 = vmatprep.mubr.bf16.mxu0 0
        %758 = vmatmul.mubr.bf16.gmra.mrb[0].mxu0 %v409
        %v759 = vpop.f32.mrb[0].mxu0
        %v760 = vadd.f32 %v365, %v759
        %v761 = vpop.f32.mrb[0].mxu0
        %v762 = vadd.f32 %v369, %v761
        %v763 = vpop.f32.mrb[0].mxu0
        %v764 = vadd.f32 %v365, %v763
        %v765 = vpop.f32.mrb[0].mxu0
        %v766 = vadd.f32 %v369, %v765
        %767 = vmatprep.mubr.bf16.mxu0 0
        %768 = vmatmul.mubr.bf16.gmra.mrb[0].mxu0 %v410
        %v769 = vpop.f32.mrb[0].mxu0
        %v770 = vadd.f32 %v365, %v769
        %v771 = vpop.f32.mrb[0].mxu0
        %v772 = vadd.f32 %v369, %v771
        %v773 = vpop.f32.mrb[0].mxu0
        %v774 = vadd.f32 %v365, %v773
        %v775 = vpop.f32.mrb[0].mxu0
        %v776 = vadd.f32 %v369, %v775
        %777 = vmatprep.mubr.bf16.mxu0 0
        %778 = vmatmul.mubr.bf16.gmra.mrb[0].mxu0 %v411
        %v779 = vpop.f32.mrb[0].mxu0
        %v780 = vadd.f32 %v365, %v779
        %v781 = vpop.f32.mrb[0].mxu0
        %v782 = vadd.f32 %v369, %v781
        %v783 = vpop.f32.mrb[0].mxu0
        %v784 = vadd.f32 %v365, %v783
        %v785 = vpop.f32.mrb[0].mxu0
        %v786 = vadd.f32 %v369, %v785
        %787 = vmatprep.mubr.bf16.mxu0 0
        %788 = vmatmul.mubr.bf16.gmra.mrb[0].mxu0 %v412
        %v789 = vpop.f32.mrb[0].mxu0
        %v790 = vadd.f32 %v365, %v789
        %v791 = vpop.f32.mrb[0].mxu0
        %v792 = vadd.f32 %v369, %v791
        %v793 = vpop.f32.mrb[0].mxu0
        %v794 = vadd.f32 %v365, %v793
        %v795 = vpop.f32.mrb[0].mxu0
        %v796 = vadd.f32 %v369, %v795
        %797 = vmatprep.mubr.bf16.mxu0 0
        %798 = vmatmul.mubr.bf16.gmra.mrb[0].mxu0 %v413
        %v799 = vpop.f32.mrb[0].mxu0
        %v800 = vadd.f32 %v365, %v799
        %v801 = vpop.f32.mrb[0].mxu0
        %v802 = vadd.f32 %v369, %v801
        %v803 = vpop.f32.mrb[0].mxu0
        %v804 = vadd.f32 %v365, %v803
        %v805 = vpop.f32.mrb[0].mxu0
        %v806 = vadd.f32 %v369, %v805
        %807 = vdwg.mxu0
        %v808 = vmax.f32 %v617, 0.0
        %v809 = vmax.f32 %v619, 0.0
        %v810 = vmax.f32 %v730, 0.0
        %v811 = vmax.f32 %v732, 0.0
        %v812 = vmax.f32 %v621, 0.0
        %v813 = vmax.f32 %v623, 0.0
        %v814 = vmax.f32 %v734, 0.0
        %v815 = vmax.f32 %v736, 0.0
        %v816 = vmax.f32 %v627, 0.0
        %v817 = vmax.f32 %v629, 0.0
        %v818 = vmax.f32 %v740, 0.0
        %v819 = vmax.f32 %v742, 0.0
        %v820 = vmax.f32 %v631, 0.0
        %v821 = vmax.f32 %v633, 0.0
        %v822 = vmax.f32 %v744, 0.0
        %v823 = vmax.f32 %v746, 0.0
        %v824 = vmax.f32 %v637, 0.0
        %v825 = vmax.f32 %v639, 0.0
        %v826 = vmax.f32 %v750, 0.0
        %v827 = vmax.f32 %v752, 0.0
        %v828 = vmax.f32 %v641, 0.0
        %v829 = vmax.f32 %v643, 0.0
        %v830 = vmax.f32 %v754, 0.0
        %v831 = vmax.f32 %v756, 0.0
        %v832 = vmax.f32 %v647, 0.0
        %v833 = vmax.f32 %v649, 0.0
        %v834 = vmax.f32 %v760, 0.0
        %v835 = vmax.f32 %v762, 0.0
        %v836 = vmax.f32 %v651, 0.0
        %v837 = vmax.f32 %v653, 0.0
        %v838 = vmax.f32 %v764, 0.0
        %v839 = vmax.f32 %v766, 0.0
        %v840 = vmax.f32 %v657, 0.0
        %v841 = vmax.f32 %v659, 0.0
        %v842 = vmax.f32 %v770, 0.0
        %v843 = vmax.f32 %v772, 0.0
        %v844 = vmax.f32 %v661, 0.0
        %v845 = vmax.f32 %v663, 0.0
        %v846 = vmax.f32 %v774, 0.0
        %v847 = vmax.f32 %v776, 0.0
        %v848 = vmax.f32 %v667, 0.0
        %v849 = vmax.f32 %v669, 0.0
        %v850 = vmax.f32 %v780, 0.0
        %v851 = vmax.f32 %v782, 0.0
        %v852 = vmax.f32 %v671, 0.0
        %v853 = vmax.f32 %v673, 0.0
        %v854 = vmax.f32 %v784, 0.0
        %v855 = vmax.f32 %v786, 0.0
        %v856 = vmax.f32 %v677, 0.0
        %v857 = vmax.f32 %v679, 0.0
        %v858 = vmax.f32 %v790, 0.0
        %v859 = vmax.f32 %v792, 0.0
        %v860 = vmax.f32 %v681, 0.0
        %v861 = vmax.f32 %v683, 0.0
        %v862 = vmax.f32 %v794, 0.0
        %v863 = vmax.f32 %v796, 0.0
        %v864 = vmax.f32 %v687, 0.0
        %v865 = vmax.f32 %v689, 0.0
        %v866 = vmax.f32 %v800, 0.0
        %v867 = vmax.f32 %v802, 0.0
        %v868 = vmax.f32 %v691, 0.0
        %v869 = vmax.f32 %v693, 0.0
        %v870 = vmax.f32 %v804, 0.0
        %v871 = vmax.f32 %v806, 0.0
        %v872 = vpack.c.bf16 %v812, %v808
        %v873 = vpack.c.bf16 %v813, %v809
        %v874 = vpack.c.bf16 %v814, %v810
        %v875 = vpack.c.bf16 %v815, %v811
        %v876 = vpack.c.bf16 %v820, %v816
        %v877 = vpack.c.bf16 %v821, %v817
        %v878 = vpack.c.bf16 %v822, %v818
        %v879 = vpack.c.bf16 %v823, %v819
        %v880 = vpack.c.bf16 %v828, %v824
        %v881 = vpack.c.bf16 %v829, %v825
        %v882 = vpack.c.bf16 %v830, %v826
        %v883 = vpack.c.bf16 %v831, %v827
        %v884 = vpack.c.bf16 %v836, %v832
        %v885 = vpack.c.bf16 %v837, %v833
        %v886 = vpack.c.bf16 %v838, %v834
        %v887 = vpack.c.bf16 %v839, %v835
        %v888 = vpack.c.bf16 %v844, %v840
        %v889 = vpack.c.bf16 %v845, %v841
        %v890 = vpack.c.bf16 %v846, %v842
        %v891 = vpack.c.bf16 %v847, %v843
        %v892 = vpack.c.bf16 %v852, %v848
        %v893 = vpack.c.bf16 %v853, %v849
        %v894 = vpack.c.bf16 %v854, %v850
        %v895 = vpack.c.bf16 %v855, %v851
        %v896 = vpack.c.bf16 %v860, %v856
        %v897 = vpack.c.bf16 %v861, %v857
        %v898 = vpack.c.bf16 %v862, %v858
        %v899 = vpack.c.bf16 %v863, %v859
        %v900 = vpack.c.bf16 %v868, %v864
        %v901 = vpack.c.bf16 %v869, %v865
        %v902 = vpack.c.bf16 %v870, %v866
        %v903 = vpack.c.bf16 %v871, %v867
        %v904 = vld [vmem:[#allocation6] sm:$0xff]
        %v905 = vld [vmem:[#allocation6 + $0x8] sm:$0xff]
        %v906 = vld [vmem:[#allocation6 + $0x10] sm:$0xff]
        %v907 = vld [vmem:[#allocation6 + $0x18] sm:$0xff]
        %v908 = vld [vmem:[#allocation6 + $0x20] sm:$0xff]
        %v909 = vld [vmem:[#allocation6 + $0x28] sm:$0xff]
        %v910 = vld [vmem:[#allocation6 + $0x30] sm:$0xff]
        %v911 = vld [vmem:[#allocation6 + $0x38] sm:$0xff]
        %v912 = vld [vmem:[#allocation6 + $0x40] sm:$0xff]
        %v913 = vld [vmem:[#allocation6 + $0x48] sm:$0xff]
        %v914 = vld [vmem:[#allocation6 + $0x50] sm:$0xff]
        %v915 = vld [vmem:[#allocation6 + $0x58] sm:$0xff]
        %v916 = vld [vmem:[#allocation6 + $0x60] sm:$0xff]
        %v917 = vld [vmem:[#allocation6 + $0x68] sm:$0xff]
        %v918 = vld [vmem:[#allocation6 + $0x70] sm:$0xff]
        %v919 = vld [vmem:[#allocation6 + $0x78] sm:$0xff]
        %v920 = vld [vmem:[#allocation6 + $0x80] sm:$0xff]
        %v921 = vld [vmem:[#allocation6 + $0x88] sm:$0xff]
        %v922 = vld [vmem:[#allocation6 + $0x90] sm:$0xff]
        %v923 = vld [vmem:[#allocation6 + $0x98] sm:$0xff]
        %v924 = vld [vmem:[#allocation6 + $0xa0] sm:$0xff]
        %v925 = vld [vmem:[#allocation6 + $0xa8] sm:$0xff]
        %v926 = vld [vmem:[#allocation6 + $0xb0] sm:$0xff]
        %v927 = vld [vmem:[#allocation6 + $0xb8] sm:$0xff]
        %v928 = vld [vmem:[#allocation6 + $0xc0] sm:$0xff]
        %v929 = vld [vmem:[#allocation6 + $0xc8] sm:$0xff]
        %v930 = vld [vmem:[#allocation6 + $0xd0] sm:$0xff]
        %v931 = vld [vmem:[#allocation6 + $0xd8] sm:$0xff]
        %v932 = vld [vmem:[#allocation6 + $0xe0] sm:$0xff]
        %v933 = vld [vmem:[#allocation6 + $0xe8] sm:$0xff]
        %v934 = vld [vmem:[#allocation6 + $0xf0] sm:$0xff]
        %v935 = vld [vmem:[#allocation6 + $0xf8] sm:$0xff]
        %v936 = vld [vmem:[#allocation6 + $0x100] sm:$0xff]
        %v937 = vld [vmem:[#allocation6 + $0x108] sm:$0xff]
        %v938 = vld [vmem:[#allocation6 + $0x110] sm:$0xff]
        %v939 = vld [vmem:[#allocation6 + $0x118] sm:$0xff]
        %v940 = vld [vmem:[#allocation6 + $0x120] sm:$0xff]
        %v941 = vld [vmem:[#allocation6 + $0x128] sm:$0xff]
        %v942 = vld [vmem:[#allocation6 + $0x130] sm:$0xff]
        %v943 = vld [vmem:[#allocation6 + $0x138] sm:$0xff]
        %v944 = vld [vmem:[#allocation6 + $0x140] sm:$0xff]
        %v945 = vld [vmem:[#allocation6 + $0x148] sm:$0xff]
        %v946 = vld [vmem:[#allocation6 + $0x150] sm:$0xff]
        %v947 = vld [vmem:[#allocation6 + $0x158] sm:$0xff]
        %v948 = vld [vmem:[#allocation6 + $0x160] sm:$0xff]
        %v949 = vld [vmem:[#allocation6 + $0x168] sm:$0xff]
        %v950 = vld [vmem:[#allocation6 + $0x170] sm:$0xff]
        %v951 = vld [vmem:[#allocation6 + $0x178] sm:$0xff]
        %v952 = vld [vmem:[#allocation6 + $0x180] sm:$0xff]
        %v953 = vld [vmem:[#allocation6 + $0x188] sm:$0xff]
        %v954 = vld [vmem:[#allocation6 + $0x190] sm:$0xff]
        %v955 = vld [vmem:[#allocation6 + $0x198] sm:$0xff]
        %v956 = vld [vmem:[#allocation6 + $0x1a0] sm:$0xff]
        %v957 = vld [vmem:[#allocation6 + $0x1a8] sm:$0xff]
        %v958 = vld [vmem:[#allocation6 + $0x1b0] sm:$0xff]
        %v959 = vld [vmem:[#allocation6 + $0x1b8] sm:$0xff]
        %v960 = vld [vmem:[#allocation6 + $0x1c0] sm:$0xff]
        %v961 = vld [vmem:[#allocation6 + $0x1c8] sm:$0xff]
        %v962 = vld [vmem:[#allocation6 + $0x1d0] sm:$0xff]
        %v963 = vld [vmem:[#allocation6 + $0x1d8] sm:$0xff]
        %v964 = vld [vmem:[#allocation6 + $0x1e0] sm:$0xff]
        %v965 = vld [vmem:[#allocation6 + $0x1e8] sm:$0xff]
        %v966 = vld [vmem:[#allocation6 + $0x1f0] sm:$0xff]
        %v967 = vld [vmem:[#allocation6 + $0x1f8] sm:$0xff]
        %s968 = scalar_lea.vmem [#allocation9], 1
        %v969 = vld [vmem:[%s968] ss:$8 sm:$0x3]
        %v971 = vlaneseq
        %v972 = vshrl.u32 %v971, 7
        %v973 = vsub.s32 0, %v972
        %v974 = vrot.slane %v969, %v973
        %v975 = vlaneseq
        %v976 = vshrl.u32 %v975, 7
        %v977 = vsub.s32 1, %v976
        %v978 = vrot.slane %v969, %v977
        %v1045 = vunpack.c.l.b16 %v904
        %v1046 = vunpack.c.h.b16 %v904
        %v1047 = vunpack.c.l.b16 %v905
        %v1048 = vunpack.c.h.b16 %v905
        %v1049 = vunpack.c.l.b16 %v906
        %v1050 = vunpack.c.h.b16 %v906
        %v1051 = vunpack.c.l.b16 %v907
        %v1052 = vunpack.c.h.b16 %v907
        %v1053 = vunpack.c.l.b16 %v908
        %v1054 = vunpack.c.h.b16 %v908
        %v1055 = vunpack.c.l.b16 %v909
        %v1056 = vunpack.c.h.b16 %v909
        %v1057 = vunpack.c.l.b16 %v910
        %v1058 = vunpack.c.h.b16 %v910
        %v1059 = vunpack.c.l.b16 %v911
        %v1060 = vunpack.c.h.b16 %v911
        %v1061 = vunpack.c.l.b16 %v912
        %v1062 = vunpack.c.h.b16 %v912
        %v1063 = vunpack.c.l.b16 %v913
        %v1064 = vunpack.c.h.b16 %v913
        %v1065 = vunpack.c.l.b16 %v914
        %v1066 = vunpack.c.h.b16 %v914
        %v1067 = vunpack.c.l.b16 %v915
        %v1068 = vunpack.c.h.b16 %v915
        %v1069 = vunpack.c.l.b16 %v916
        %v1070 = vunpack.c.h.b16 %v916
        %v1071 = vunpack.c.l.b16 %v917
        %v1072 = vunpack.c.h.b16 %v917
        %v1073 = vunpack.c.l.b16 %v918
        %v1074 = vunpack.c.h.b16 %v918
        %v1075 = vunpack.c.l.b16 %v919
        %v1076 = vunpack.c.h.b16 %v919
        %v1077 = vunpack.c.l.b16 %v920
        %v1078 = vunpack.c.h.b16 %v920
        %v1079 = vunpack.c.l.b16 %v921
        %v1080 = vunpack.c.h.b16 %v921
        %v1081 = vunpack.c.l.b16 %v922
        %v1082 = vunpack.c.h.b16 %v922
        %v1083 = vunpack.c.l.b16 %v923
        %v1084 = vunpack.c.h.b16 %v923
        %v1085 = vunpack.c.l.b16 %v924
        %v1086 = vunpack.c.h.b16 %v924
        %v1087 = vunpack.c.l.b16 %v925
        %v1088 = vunpack.c.h.b16 %v925
        %v1089 = vunpack.c.l.b16 %v926
        %v1090 = vunpack.c.h.b16 %v926
        %v1091 = vunpack.c.l.b16 %v927
        %v1092 = vunpack.c.h.b16 %v927
        %v1093 = vunpack.c.l.b16 %v928
        %v1094 = vunpack.c.h.b16 %v928
        %v1095 = vunpack.c.l.b16 %v929
        %v1096 = vunpack.c.h.b16 %v929
        %v1097 = vunpack.c.l.b16 %v930
        %v1098 = vunpack.c.h.b16 %v930
        %v1099 = vunpack.c.l.b16 %v931
        %v1100 = vunpack.c.h.b16 %v931
        %v1101 = vunpack.c.l.b16 %v932
        %v1102 = vunpack.c.h.b16 %v932
        %v1103 = vunpack.c.l.b16 %v933
        %v1104 = vunpack.c.h.b16 %v933
        %v1105 = vunpack.c.l.b16 %v934
        %v1106 = vunpack.c.h.b16 %v934
        %v1107 = vunpack.c.l.b16 %v935
        %v1108 = vunpack.c.h.b16 %v935
        %v1109 = vunpack.c.l.b16 %v936
        %v1110 = vunpack.c.h.b16 %v936
        %v1111 = vunpack.c.l.b16 %v937
        %v1112 = vunpack.c.h.b16 %v937
        %v1113 = vunpack.c.l.b16 %v938
        %v1114 = vunpack.c.h.b16 %v938
        %v1115 = vunpack.c.l.b16 %v939
        %v1116 = vunpack.c.h.b16 %v939
        %v1117 = vunpack.c.l.b16 %v940
        %v1118 = vunpack.c.h.b16 %v940
        %v1119 = vunpack.c.l.b16 %v941
        %v1120 = vunpack.c.h.b16 %v941
        %v1121 = vunpack.c.l.b16 %v942
        %v1122 = vunpack.c.h.b16 %v942
        %v1123 = vunpack.c.l.b16 %v943
        %v1124 = vunpack.c.h.b16 %v943
        %v1125 = vunpack.c.l.b16 %v944
        %v1126 = vunpack.c.h.b16 %v944
        %v1127 = vunpack.c.l.b16 %v945
        %v1128 = vunpack.c.h.b16 %v945
        %v1129 = vunpack.c.l.b16 %v946
        %v1130 = vunpack.c.h.b16 %v946
        %v1131 = vunpack.c.l.b16 %v947
        %v1132 = vunpack.c.h.b16 %v947
        %v1133 = vunpack.c.l.b16 %v948
        %v1134 = vunpack.c.h.b16 %v948
        %v1135 = vunpack.c.l.b16 %v949
        %v1136 = vunpack.c.h.b16 %v949
        %v1137 = vunpack.c.l.b16 %v950
        %v1138 = vunpack.c.h.b16 %v950
        %v1139 = vunpack.c.l.b16 %v951
        %v1140 = vunpack.c.h.b16 %v951
        %v1141 = vunpack.c.l.b16 %v952
        %v1142 = vunpack.c.h.b16 %v952
        %v1143 = vunpack.c.l.b16 %v953
        %v1144 = vunpack.c.h.b16 %v953
        %v1145 = vunpack.c.l.b16 %v954
        %v1146 = vunpack.c.h.b16 %v954
        %v1147 = vunpack.c.l.b16 %v955
        %v1148 = vunpack.c.h.b16 %v955
        %v1149 = vunpack.c.l.b16 %v956
        %v1150 = vunpack.c.h.b16 %v956
        %v1151 = vunpack.c.l.b16 %v957
        %v1152 = vunpack.c.h.b16 %v957
        %v1153 = vunpack.c.l.b16 %v958
        %v1154 = vunpack.c.h.b16 %v958
        %v1155 = vunpack.c.l.b16 %v959
        %v1156 = vunpack.c.h.b16 %v959
        %v1157 = vunpack.c.l.b16 %v960
        %v1158 = vunpack.c.h.b16 %v960
        %v1159 = vunpack.c.l.b16 %v961
        %v1160 = vunpack.c.h.b16 %v961
        %v1161 = vunpack.c.l.b16 %v962
        %v1162 = vunpack.c.h.b16 %v962
        %v1163 = vunpack.c.l.b16 %v963
        %v1164 = vunpack.c.h.b16 %v963
        %v1165 = vunpack.c.l.b16 %v964
        %v1166 = vunpack.c.h.b16 %v964
        %v1167 = vunpack.c.l.b16 %v965
        %v1168 = vunpack.c.h.b16 %v965
        %v1169 = vunpack.c.l.b16 %v966
        %v1170 = vunpack.c.h.b16 %v966
        %v1171 = vunpack.c.l.b16 %v967
        %v1172 = vunpack.c.h.b16 %v967
        %v1173 = vpack.c.b16 %v1047, %v1045
        %v1174 = vpack.c.b16 %v1048, %v1046
        %v1175 = vpack.c.b16 %v1051, %v1049
        %v1176 = vpack.c.b16 %v1052, %v1050
        %v1177 = vpack.c.b16 %v1055, %v1053
        %v1178 = vpack.c.b16 %v1056, %v1054
        %v1179 = vpack.c.b16 %v1059, %v1057
        %v1180 = vpack.c.b16 %v1060, %v1058
        %v1181 = vpack.c.b16 %v1063, %v1061
        %v1182 = vpack.c.b16 %v1064, %v1062
        %v1183 = vpack.c.b16 %v1067, %v1065
        %v1184 = vpack.c.b16 %v1068, %v1066
        %v1185 = vpack.c.b16 %v1071, %v1069
        %v1186 = vpack.c.b16 %v1072, %v1070
        %v1187 = vpack.c.b16 %v1075, %v1073
        %v1188 = vpack.c.b16 %v1076, %v1074
        %v1189 = vpack.c.b16 %v1079, %v1077
        %v1190 = vpack.c.b16 %v1080, %v1078
        %v1191 = vpack.c.b16 %v1083, %v1081
        %v1192 = vpack.c.b16 %v1084, %v1082
        %v1193 = vpack.c.b16 %v1087, %v1085
        %v1194 = vpack.c.b16 %v1088, %v1086
        %v1195 = vpack.c.b16 %v1091, %v1089
        %v1196 = vpack.c.b16 %v1092, %v1090
        %v1197 = vpack.c.b16 %v1095, %v1093
        %v1198 = vpack.c.b16 %v1096, %v1094
        %v1199 = vpack.c.b16 %v1099, %v1097
        %v1200 = vpack.c.b16 %v1100, %v1098
        %v1201 = vpack.c.b16 %v1103, %v1101
        %v1202 = vpack.c.b16 %v1104, %v1102
        %v1203 = vpack.c.b16 %v1107, %v1105
        %v1204 = vpack.c.b16 %v1108, %v1106
        %v1205 = vpack.c.b16 %v1111, %v1109
        %v1206 = vpack.c.b16 %v1112, %v1110
        %v1207 = vpack.c.b16 %v1115, %v1113
        %v1208 = vpack.c.b16 %v1116, %v1114
        %v1209 = vpack.c.b16 %v1119, %v1117
        %v1210 = vpack.c.b16 %v1120, %v1118
        %v1211 = vpack.c.b16 %v1123, %v1121
        %v1212 = vpack.c.b16 %v1124, %v1122
        %v1213 = vpack.c.b16 %v1127, %v1125
        %v1214 = vpack.c.b16 %v1128, %v1126
        %v1215 = vpack.c.b16 %v1131, %v1129
        %v1216 = vpack.c.b16 %v1132, %v1130
        %v1217 = vpack.c.b16 %v1135, %v1133
        %v1218 = vpack.c.b16 %v1136, %v1134
        %v1219 = vpack.c.b16 %v1139, %v1137
        %v1220 = vpack.c.b16 %v1140, %v1138
        %v1221 = vpack.c.b16 %v1143, %v1141
        %v1222 = vpack.c.b16 %v1144, %v1142
        %v1223 = vpack.c.b16 %v1147, %v1145
        %v1224 = vpack.c.b16 %v1148, %v1146
        %v1225 = vpack.c.b16 %v1151, %v1149
        %v1226 = vpack.c.b16 %v1152, %v1150
        %v1227 = vpack.c.b16 %v1155, %v1153
        %v1228 = vpack.c.b16 %v1156, %v1154
        %v1229 = vpack.c.b16 %v1159, %v1157
        %v1230 = vpack.c.b16 %v1160, %v1158
        %v1231 = vpack.c.b16 %v1163, %v1161
        %v1232 = vpack.c.b16 %v1164, %v1162
        %v1233 = vpack.c.b16 %v1167, %v1165
        %v1234 = vpack.c.b16 %v1168, %v1166
        %v1235 = vpack.c.b16 %v1171, %v1169
        %v1236 = vpack.c.b16 %v1172, %v1170
        %1301 = vmatprep.subr.bf16.mxu0 %v1174
        %1302 = vmatpush1.bf16.msra.mxu0 %v1173
        %1303 = vmatprep.subr.bf16.mxu0 %v1176
        %1304 = vmatpush1.bf16.msra.mxu0 %v1175
        %1305 = vmatprep.subr.bf16.mxu0 %v1178
        %1306 = vmatpush1.bf16.msra.mxu0 %v1177
        %1307 = vmatprep.subr.bf16.mxu0 %v1180
        %1308 = vmatpush1.bf16.msra.mxu0 %v1179
        %1309 = vmatprep.subr.bf16.mxu0 %v1182
        %1310 = vmatpush1.bf16.msra.mxu0 %v1181
        %1311 = vmatprep.subr.bf16.mxu0 %v1184
        %1312 = vmatpush1.bf16.msra.mxu0 %v1183
        %1313 = vmatprep.subr.bf16.mxu0 %v1186
        %1314 = vmatpush1.bf16.msra.mxu0 %v1185
        %1315 = vmatprep.subr.bf16.mxu0 %v1188
        %1316 = vmatpush1.bf16.msra.mxu0 %v1187
        %1317 = vmatprep.subr.bf16.mxu0 %v1190
        %1318 = vmatpush1.bf16.msra.mxu0 %v1189
        %1319 = vmatprep.subr.bf16.mxu0 %v1192
        %1320 = vmatpush1.bf16.msra.mxu0 %v1191
        %1321 = vmatprep.subr.bf16.mxu0 %v1194
        %1322 = vmatpush1.bf16.msra.mxu0 %v1193
        %1323 = vmatprep.subr.bf16.mxu0 %v1196
        %1324 = vmatpush1.bf16.msra.mxu0 %v1195
        %1325 = vmatprep.subr.bf16.mxu0 %v1198
        %1326 = vmatpush1.bf16.msra.mxu0 %v1197
        %1327 = vmatprep.subr.bf16.mxu0 %v1200
        %1328 = vmatpush1.bf16.msra.mxu0 %v1199
        %1329 = vmatprep.subr.bf16.mxu0 %v1202
        %1330 = vmatpush1.bf16.msra.mxu0 %v1201
        %1331 = vmatprep.subr.bf16.mxu0 %v1204
        %1332 = vmatpush1.bf16.msra.mxu0 %v1203
        %1333 = vmatprep.mubr.bf16.mxu0 %v873
        %1334 = vmatmul.mubr.bf16.gmra.mrb[0].mxu0 %v872
        %v1335 = vpop.f32.mrb[0].mxu0
        %v1336 = vadd.f32 %v974, %v1335
        %v1337 = vpop.f32.mrb[0].mxu0
        %v1338 = vadd.f32 %v978, %v1337
        %v1339 = vpop.f32.mrb[0].mxu0
        %v1340 = vadd.f32 %v974, %v1339
        %v1341 = vpop.f32.mrb[0].mxu0
        %v1342 = vadd.f32 %v978, %v1341
        %1343 = vmatprep.mubr.bf16.mxu0 %v877
        %1344 = vmatmul.mubr.bf16.gmra.mrb[0].mxu0 %v876
        %v1345 = vpop.f32.mrb[0].mxu0
        %v1346 = vadd.f32 %v974, %v1345
        %v1347 = vpop.f32.mrb[0].mxu0
        %v1348 = vadd.f32 %v978, %v1347
        %v1349 = vpop.f32.mrb[0].mxu0
        %v1350 = vadd.f32 %v974, %v1349
        %v1351 = vpop.f32.mrb[0].mxu0
        %v1352 = vadd.f32 %v978, %v1351
        %1353 = vmatprep.mubr.bf16.mxu0 %v881
        %1354 = vmatmul.mubr.bf16.gmra.mrb[0].mxu0 %v880
        %v1355 = vpop.f32.mrb[0].mxu0
        %v1356 = vadd.f32 %v974, %v1355
        %v1357 = vpop.f32.mrb[0].mxu0
        %v1358 = vadd.f32 %v978, %v1357
        %v1359 = vpop.f32.mrb[0].mxu0
        %v1360 = vadd.f32 %v974, %v1359
        %v1361 = vpop.f32.mrb[0].mxu0
        %v1362 = vadd.f32 %v978, %v1361
        %1363 = vmatprep.mubr.bf16.mxu0 %v885
        %1364 = vmatmul.mubr.bf16.gmra.mrb[0].mxu0 %v884
        %v1365 = vpop.f32.mrb[0].mxu0
        %v1366 = vadd.f32 %v974, %v1365
        %v1367 = vpop.f32.mrb[0].mxu0
        %v1368 = vadd.f32 %v978, %v1367
        %v1369 = vpop.f32.mrb[0].mxu0
        %v1370 = vadd.f32 %v974, %v1369
        %v1371 = vpop.f32.mrb[0].mxu0
        %v1372 = vadd.f32 %v978, %v1371
        %1373 = vmatprep.mubr.bf16.mxu0 %v889
        %1374 = vmatmul.mubr.bf16.gmra.mrb[0].mxu0 %v888
        %v1375 = vpop.f32.mrb[0].mxu0
        %v1376 = vadd.f32 %v974, %v1375
        %v1377 = vpop.f32.mrb[0].mxu0
        %v1378 = vadd.f32 %v978, %v1377
        %v1379 = vpop.f32.mrb[0].mxu0
        %v1380 = vadd.f32 %v974, %v1379
        %v1381 = vpop.f32.mrb[0].mxu0
        %v1382 = vadd.f32 %v978, %v1381
        %1383 = vmatprep.mubr.bf16.mxu0 %v893
        %1384 = vmatmul.mubr.bf16.gmra.mrb[0].mxu0 %v892
        %v1385 = vpop.f32.mrb[0].mxu0
        %v1386 = vadd.f32 %v974, %v1385
        %v1387 = vpop.f32.mrb[0].mxu0
        %v1388 = vadd.f32 %v978, %v1387
        %v1389 = vpop.f32.mrb[0].mxu0
        %v1390 = vadd.f32 %v974, %v1389
        %v1391 = vpop.f32.mrb[0].mxu0
        %v1392 = vadd.f32 %v978, %v1391
        %1393 = vmatprep.mubr.bf16.mxu0 %v897
        %1394 = vmatmul.mubr.bf16.gmra.mrb[0].mxu0 %v896
        %v1395 = vpop.f32.mrb[0].mxu0
        %v1396 = vadd.f32 %v974, %v1395
        %v1397 = vpop.f32.mrb[0].mxu0
        %v1398 = vadd.f32 %v978, %v1397
        %v1399 = vpop.f32.mrb[0].mxu0
        %v1400 = vadd.f32 %v974, %v1399
        %v1401 = vpop.f32.mrb[0].mxu0
        %v1402 = vadd.f32 %v978, %v1401
        %1403 = vmatprep.mubr.bf16.mxu0 %v901
        %1404 = vmatmul.mubr.bf16.gmra.mrb[0].mxu0 %v900
        %v1405 = vpop.f32.mrb[0].mxu0
        %v1406 = vadd.f32 %v974, %v1405
        %v1407 = vpop.f32.mrb[0].mxu0
        %v1408 = vadd.f32 %v978, %v1407
        %v1409 = vpop.f32.mrb[0].mxu0
        %v1410 = vadd.f32 %v974, %v1409
        %v1411 = vpop.f32.mrb[0].mxu0
        %v1412 = vadd.f32 %v978, %v1411
        %1413 = vdwg.mxu0
        %1414 = vmatprep.subr.bf16.mxu0 %v1206
        %1415 = vmatpush1.bf16.msra.mxu0 %v1205
        %1416 = vmatprep.subr.bf16.mxu0 %v1208
        %1417 = vmatpush1.bf16.msra.mxu0 %v1207
        %1418 = vmatprep.subr.bf16.mxu0 %v1210
        %1419 = vmatpush1.bf16.msra.mxu0 %v1209
        %1420 = vmatprep.subr.bf16.mxu0 %v1212
        %1421 = vmatpush1.bf16.msra.mxu0 %v1211
        %1422 = vmatprep.subr.bf16.mxu0 %v1214
        %1423 = vmatpush1.bf16.msra.mxu0 %v1213
        %1424 = vmatprep.subr.bf16.mxu0 %v1216
        %1425 = vmatpush1.bf16.msra.mxu0 %v1215
        %1426 = vmatprep.subr.bf16.mxu0 %v1218
        %1427 = vmatpush1.bf16.msra.mxu0 %v1217
        %1428 = vmatprep.subr.bf16.mxu0 %v1220
        %1429 = vmatpush1.bf16.msra.mxu0 %v1219
        %1430 = vmatprep.subr.bf16.mxu0 %v1222
        %1431 = vmatpush1.bf16.msra.mxu0 %v1221
        %1432 = vmatprep.subr.bf16.mxu0 %v1224
        %1433 = vmatpush1.bf16.msra.mxu0 %v1223
        %1434 = vmatprep.subr.bf16.mxu0 %v1226
        %1435 = vmatpush1.bf16.msra.mxu0 %v1225
        %1436 = vmatprep.subr.bf16.mxu0 %v1228
        %1437 = vmatpush1.bf16.msra.mxu0 %v1227
        %1438 = vmatprep.subr.bf16.mxu0 %v1230
        %1439 = vmatpush1.bf16.msra.mxu0 %v1229
        %1440 = vmatprep.subr.bf16.mxu0 %v1232
        %1441 = vmatpush1.bf16.msra.mxu0 %v1231
        %1442 = vmatprep.subr.bf16.mxu0 %v1234
        %1443 = vmatpush1.bf16.msra.mxu0 %v1233
        %1444 = vmatprep.subr.bf16.mxu0 %v1236
        %1445 = vmatpush1.bf16.msra.mxu0 %v1235
        %1446 = vmatprep.mubr.bf16.mxu0 %v875
        %1447 = vmatmul.mubr.bf16.gmra.mrb[0].mxu0 %v874
        %v1448 = vpop.f32.mrb[0].mxu0
        %v1449 = vadd.f32 %v1336, %v1448
        %v1450 = vpop.f32.mrb[0].mxu0
        %v1451 = vadd.f32 %v1338, %v1450
        %v1452 = vpop.f32.mrb[0].mxu0
        %v1453 = vadd.f32 %v1340, %v1452
        %v1454 = vpop.f32.mrb[0].mxu0
        %v1455 = vadd.f32 %v1342, %v1454
        %1456 = vmatprep.mubr.bf16.mxu0 %v879
        %1457 = vmatmul.mubr.bf16.gmra.mrb[0].mxu0 %v878
        %v1458 = vpop.f32.mrb[0].mxu0
        %v1459 = vadd.f32 %v1346, %v1458
        %v1460 = vpop.f32.mrb[0].mxu0
        %v1461 = vadd.f32 %v1348, %v1460
        %v1462 = vpop.f32.mrb[0].mxu0
        %v1463 = vadd.f32 %v1350, %v1462
        %v1464 = vpop.f32.mrb[0].mxu0
        %v1465 = vadd.f32 %v1352, %v1464
        %1466 = vmatprep.mubr.bf16.mxu0 %v883
        %1467 = vmatmul.mubr.bf16.gmra.mrb[0].mxu0 %v882
        %v1468 = vpop.f32.mrb[0].mxu0
        %v1469 = vadd.f32 %v1356, %v1468
        %v1470 = vpop.f32.mrb[0].mxu0
        %v1471 = vadd.f32 %v1358, %v1470
        %v1472 = vpop.f32.mrb[0].mxu0
        %v1473 = vadd.f32 %v1360, %v1472
        %v1474 = vpop.f32.mrb[0].mxu0
        %v1475 = vadd.f32 %v1362, %v1474
        %1476 = vmatprep.mubr.bf16.mxu0 %v887
        %1477 = vmatmul.mubr.bf16.gmra.mrb[0].mxu0 %v886
        %v1478 = vpop.f32.mrb[0].mxu0
        %v1479 = vadd.f32 %v1366, %v1478
        %v1480 = vpop.f32.mrb[0].mxu0
        %v1481 = vadd.f32 %v1368, %v1480
        %v1482 = vpop.f32.mrb[0].mxu0
        %v1483 = vadd.f32 %v1370, %v1482
        %v1484 = vpop.f32.mrb[0].mxu0
        %v1485 = vadd.f32 %v1372, %v1484
        %1486 = vmatprep.mubr.bf16.mxu0 %v891
        %1487 = vmatmul.mubr.bf16.gmra.mrb[0].mxu0 %v890
        %v1488 = vpop.f32.mrb[0].mxu0
        %v1489 = vadd.f32 %v1376, %v1488
        %v1490 = vpop.f32.mrb[0].mxu0
        %v1491 = vadd.f32 %v1378, %v1490
        %v1492 = vpop.f32.mrb[0].mxu0
        %v1493 = vadd.f32 %v1380, %v1492
        %v1494 = vpop.f32.mrb[0].mxu0
        %v1495 = vadd.f32 %v1382, %v1494
        %1496 = vmatprep.mubr.bf16.mxu0 %v895
        %1497 = vmatmul.mubr.bf16.gmra.mrb[0].mxu0 %v894
        %v1498 = vpop.f32.mrb[0].mxu0
        %v1499 = vadd.f32 %v1386, %v1498
        %v1500 = vpop.f32.mrb[0].mxu0
        %v1501 = vadd.f32 %v1388, %v1500
        %v1502 = vpop.f32.mrb[0].mxu0
        %v1503 = vadd.f32 %v1390, %v1502
        %v1504 = vpop.f32.mrb[0].mxu0
        %v1505 = vadd.f32 %v1392, %v1504
        %1506 = vmatprep.mubr.bf16.mxu0 %v899
        %1507 = vmatmul.mubr.bf16.gmra.mrb[0].mxu0 %v898
        %v1508 = vpop.f32.mrb[0].mxu0
        %v1509 = vadd.f32 %v1396, %v1508
        %v1510 = vpop.f32.mrb[0].mxu0
        %v1511 = vadd.f32 %v1398, %v1510
        %v1512 = vpop.f32.mrb[0].mxu0
        %v1513 = vadd.f32 %v1400, %v1512
        %v1514 = vpop.f32.mrb[0].mxu0
        %v1515 = vadd.f32 %v1402, %v1514
        %1516 = vmatprep.mubr.bf16.mxu0 %v903
        %1517 = vmatmul.mubr.bf16.gmra.mrb[0].mxu0 %v902
        %v1518 = vpop.f32.mrb[0].mxu0
        %v1519 = vadd.f32 %v1406, %v1518
        %v1520 = vpop.f32.mrb[0].mxu0
        %v1521 = vadd.f32 %v1408, %v1520
        %v1522 = vpop.f32.mrb[0].mxu0
        %v1523 = vadd.f32 %v1410, %v1522
        %v1524 = vpop.f32.mrb[0].mxu0
        %v1525 = vadd.f32 %v1412, %v1524
        %1526 = vdwg.mxu0
        %v1527 = vmax.f32 %v1449, 0.0
        %v1528 = vmax.f32 %v1451, 0.0
        %v1529 = vmax.f32 %v1453, 0.0
        %v1530 = vmax.f32 %v1455, 0.0
        %v1531 = vmax.f32 %v1459, 0.0
        %v1532 = vmax.f32 %v1461, 0.0
        %v1533 = vmax.f32 %v1463, 0.0
        %v1534 = vmax.f32 %v1465, 0.0
        %v1535 = vmax.f32 %v1469, 0.0
        %v1536 = vmax.f32 %v1471, 0.0
        %v1537 = vmax.f32 %v1473, 0.0
        %v1538 = vmax.f32 %v1475, 0.0
        %v1539 = vmax.f32 %v1479, 0.0
        %v1540 = vmax.f32 %v1481, 0.0
        %v1541 = vmax.f32 %v1483, 0.0
        %v1542 = vmax.f32 %v1485, 0.0
        %v1543 = vmax.f32 %v1489, 0.0
        %v1544 = vmax.f32 %v1491, 0.0
        %v1545 = vmax.f32 %v1493, 0.0
        %v1546 = vmax.f32 %v1495, 0.0
        %v1547 = vmax.f32 %v1499, 0.0
        %v1548 = vmax.f32 %v1501, 0.0
        %v1549 = vmax.f32 %v1503, 0.0
        %v1550 = vmax.f32 %v1505, 0.0
        %v1551 = vmax.f32 %v1509, 0.0
        %v1552 = vmax.f32 %v1511, 0.0
        %v1553 = vmax.f32 %v1513, 0.0
        %v1554 = vmax.f32 %v1515, 0.0
        %v1555 = vmax.f32 %v1519, 0.0
        %v1556 = vmax.f32 %v1521, 0.0
        %v1557 = vmax.f32 %v1523, 0.0
        %v1558 = vmax.f32 %v1525, 0.0
        %v1559 = vpack.c.bf16 %v1529, %v1527
        %v1560 = vpack.c.bf16 %v1530, %v1528
        %v1561 = vpack.c.bf16 %v1533, %v1531
        %v1562 = vpack.c.bf16 %v1534, %v1532
        %v1563 = vpack.c.bf16 %v1537, %v1535
        %v1564 = vpack.c.bf16 %v1538, %v1536
        %v1565 = vpack.c.bf16 %v1541, %v1539
        %v1566 = vpack.c.bf16 %v1542, %v1540
        %v1567 = vpack.c.bf16 %v1545, %v1543
        %v1568 = vpack.c.bf16 %v1546, %v1544
        %v1569 = vpack.c.bf16 %v1549, %v1547
        %v1570 = vpack.c.bf16 %v1550, %v1548
        %v1571 = vpack.c.bf16 %v1553, %v1551
        %v1572 = vpack.c.bf16 %v1554, %v1552
        %v1573 = vpack.c.bf16 %v1557, %v1555
        %v1574 = vpack.c.bf16 %v1558, %v1556
        %v1575 = vld [vmem:[#allocation7] sm:$0xf]
        %v1576 = vld [vmem:[#allocation7 + $0x4] sm:$0xf]
        %v1577 = vld [vmem:[#allocation7 + $0x8] sm:$0xf]
        %v1578 = vld [vmem:[#allocation7 + $0xc] sm:$0xf]
        %v1579 = vld [vmem:[#allocation7 + $0x10] sm:$0xf]
        %v1580 = vld [vmem:[#allocation7 + $0x14] sm:$0xf]
        %v1581 = vld [vmem:[#allocation7 + $0x18] sm:$0xf]
        %v1582 = vld [vmem:[#allocation7 + $0x1c] sm:$0xf]
        %v1583 = vld [vmem:[#allocation7 + $0x20] sm:$0xf]
        %v1584 = vld [vmem:[#allocation7 + $0x24] sm:$0xf]
        %v1585 = vld [vmem:[#allocation7 + $0x28] sm:$0xf]
        %v1586 = vld [vmem:[#allocation7 + $0x2c] sm:$0xf]
        %v1587 = vld [vmem:[#allocation7 + $0x30] sm:$0xf]
        %v1588 = vld [vmem:[#allocation7 + $0x34] sm:$0xf]
        %v1589 = vld [vmem:[#allocation7 + $0x38] sm:$0xf]
        %v1590 = vld [vmem:[#allocation7 + $0x3c] sm:$0xf]
        %v1591 = vld [vmem:[#allocation7 + $0x40] sm:$0xf]
        %v1592 = vld [vmem:[#allocation7 + $0x44] sm:$0xf]
        %v1593 = vld [vmem:[#allocation7 + $0x48] sm:$0xf]
        %v1594 = vld [vmem:[#allocation7 + $0x4c] sm:$0xf]
        %v1595 = vld [vmem:[#allocation7 + $0x50] sm:$0xf]
        %v1596 = vld [vmem:[#allocation7 + $0x54] sm:$0xf]
        %v1597 = vld [vmem:[#allocation7 + $0x58] sm:$0xf]
        %v1598 = vld [vmem:[#allocation7 + $0x5c] sm:$0xf]
        %v1599 = vld [vmem:[#allocation7 + $0x60] sm:$0xf]
        %v1600 = vld [vmem:[#allocation7 + $0x64] sm:$0xf]
        %v1601 = vld [vmem:[#allocation7 + $0x68] sm:$0xf]
        %v1602 = vld [vmem:[#allocation7 + $0x6c] sm:$0xf]
        %v1603 = vld [vmem:[#allocation7 + $0x70] sm:$0xf]
        %v1604 = vld [vmem:[#allocation7 + $0x74] sm:$0xf]
        %v1605 = vld [vmem:[#allocation7 + $0x78] sm:$0xf]
        %v1606 = vld [vmem:[#allocation7 + $0x7c] sm:$0xf]
        %v1607 = vld [vmem:[#allocation9 + $0x2] ss:$0 sm:$0xff]
        %v1640 = vunpack.c.l.b16 %v1575
        %v1641 = vunpack.c.l.b16 %v1576
        %v1642 = vunpack.c.l.b16 %v1577
        %v1643 = vunpack.c.l.b16 %v1578
        %v1644 = vunpack.c.l.b16 %v1579
        %v1645 = vunpack.c.l.b16 %v1580
        %v1646 = vunpack.c.l.b16 %v1581
        %v1647 = vunpack.c.l.b16 %v1582
        %v1648 = vunpack.c.l.b16 %v1583
        %v1649 = vunpack.c.l.b16 %v1584
        %v1650 = vunpack.c.l.b16 %v1585
        %v1651 = vunpack.c.l.b16 %v1586
        %v1652 = vunpack.c.l.b16 %v1587
        %v1653 = vunpack.c.l.b16 %v1588
        %v1654 = vunpack.c.l.b16 %v1589
        %v1655 = vunpack.c.l.b16 %v1590
        %v1656 = vunpack.c.l.b16 %v1591
        %v1657 = vunpack.c.l.b16 %v1592
        %v1658 = vunpack.c.l.b16 %v1593
        %v1659 = vunpack.c.l.b16 %v1594
        %v1660 = vunpack.c.l.b16 %v1595
        %v1661 = vunpack.c.l.b16 %v1596
        %v1662 = vunpack.c.l.b16 %v1597
        %v1663 = vunpack.c.l.b16 %v1598
        %v1664 = vunpack.c.l.b16 %v1599
        %v1665 = vunpack.c.l.b16 %v1600
        %v1666 = vunpack.c.l.b16 %v1601
        %v1667 = vunpack.c.l.b16 %v1602
        %v1668 = vunpack.c.l.b16 %v1603
        %v1669 = vunpack.c.l.b16 %v1604
        %v1670 = vunpack.c.l.b16 %v1605
        %v1671 = vunpack.c.l.b16 %v1606
        %v1672 = vpack.c.b16 %v1641, %v1640
        %v1673 = vpack.c.b16 %v1643, %v1642
        %v1674 = vpack.c.b16 %v1645, %v1644
        %v1675 = vpack.c.b16 %v1647, %v1646
        %v1676 = vpack.c.b16 %v1649, %v1648
        %v1677 = vpack.c.b16 %v1651, %v1650
        %v1678 = vpack.c.b16 %v1653, %v1652
        %v1679 = vpack.c.b16 %v1655, %v1654
        %v1680 = vpack.c.b16 %v1657, %v1656
        %v1681 = vpack.c.b16 %v1659, %v1658
        %v1682 = vpack.c.b16 %v1661, %v1660
        %v1683 = vpack.c.b16 %v1663, %v1662
        %v1684 = vpack.c.b16 %v1665, %v1664
        %v1685 = vpack.c.b16 %v1667, %v1666
        %v1686 = vpack.c.b16 %v1669, %v1668
        %v1687 = vpack.c.b16 %v1671, %v1670
        %1704 = vmatprep.subr.bf16.mxu0 0
        %1705 = vmatpush1.bf16.msra.mxu0 %v1672
        %1706 = vmatprep.subr.bf16.mxu0 0
        %1707 = vmatpush1.bf16.msra.mxu0 %v1673
        %1708 = vmatprep.subr.bf16.mxu0 0
        %1709 = vmatpush1.bf16.msra.mxu0 %v1674
        %1710 = vmatprep.subr.bf16.mxu0 0
        %1711 = vmatpush1.bf16.msra.mxu0 %v1675
        %1712 = vmatprep.subr.bf16.mxu0 0
        %1713 = vmatpush1.bf16.msra.mxu0 %v1676
        %1714 = vmatprep.subr.bf16.mxu0 0
        %1715 = vmatpush1.bf16.msra.mxu0 %v1677
        %1716 = vmatprep.subr.bf16.mxu0 0
        %1717 = vmatpush1.bf16.msra.mxu0 %v1678
        %1718 = vmatprep.subr.bf16.mxu0 0
        %1719 = vmatpush1.bf16.msra.mxu0 %v1679
        %1720 = vmatprep.subr.bf16.mxu0 0
        %1721 = vmatpush1.bf16.msra.mxu0 %v1680
        %1722 = vmatprep.subr.bf16.mxu0 0
        %1723 = vmatpush1.bf16.msra.mxu0 %v1681
        %1724 = vmatprep.subr.bf16.mxu0 0
        %1725 = vmatpush1.bf16.msra.mxu0 %v1682
        %1726 = vmatprep.subr.bf16.mxu0 0
        %1727 = vmatpush1.bf16.msra.mxu0 %v1683
        %1728 = vmatprep.subr.bf16.mxu0 0
        %1729 = vmatpush1.bf16.msra.mxu0 %v1684
        %1730 = vmatprep.subr.bf16.mxu0 0
        %1731 = vmatpush1.bf16.msra.mxu0 %v1685
        %1732 = vmatprep.subr.bf16.mxu0 0
        %1733 = vmatpush1.bf16.msra.mxu0 %v1686
        %1734 = vmatprep.subr.bf16.mxu0 0
        %1735 = vmatpush1.bf16.msra.mxu0 %v1687
        %1736 = vmatprep.mubr.bf16.mxu0 %v1560
        %1737 = vmatmul.mubr.bf16.gmra.mrb[0].mxu0 %v1559
        %v1738 = vpop.f32.mrb[0].mxu0
        %v1739 = vadd.f32 %v1607, %v1738
        %v1740 = vpop.f32.mrb[0].mxu0
        %v1741 = vpop.f32.mrb[0].mxu0
        %v1742 = vadd.f32 %v1607, %v1741
        %v1743 = vpop.f32.mrb[0].mxu0
        %1744 = vmatprep.mubr.bf16.mxu0 %v1562
        %1745 = vmatmul.mubr.bf16.gmra.mrb[0].mxu0 %v1561
        %v1746 = vpop.f32.mrb[0].mxu0
        %v1747 = vadd.f32 %v1607, %v1746
        %v1748 = vpop.f32.mrb[0].mxu0
        %v1749 = vpop.f32.mrb[0].mxu0
        %v1750 = vadd.f32 %v1607, %v1749
        %v1751 = vpop.f32.mrb[0].mxu0
        %1752 = vmatprep.mubr.bf16.mxu0 %v1564
        %1753 = vmatmul.mubr.bf16.gmra.mrb[0].mxu0 %v1563
        %v1754 = vpop.f32.mrb[0].mxu0
        %v1755 = vadd.f32 %v1607, %v1754
        %v1756 = vpop.f32.mrb[0].mxu0
        %v1757 = vpop.f32.mrb[0].mxu0
        %v1758 = vadd.f32 %v1607, %v1757
        %v1759 = vpop.f32.mrb[0].mxu0
        %1760 = vmatprep.mubr.bf16.mxu0 %v1566
        %1761 = vmatmul.mubr.bf16.gmra.mrb[0].mxu0 %v1565
        %v1762 = vpop.f32.mrb[0].mxu0
        %v1763 = vadd.f32 %v1607, %v1762
        %v1764 = vpop.f32.mrb[0].mxu0
        %v1765 = vpop.f32.mrb[0].mxu0
        %v1766 = vadd.f32 %v1607, %v1765
        %v1767 = vpop.f32.mrb[0].mxu0
        %1768 = vmatprep.mubr.bf16.mxu0 %v1568
        %1769 = vmatmul.mubr.bf16.gmra.mrb[0].mxu0 %v1567
        %v1770 = vpop.f32.mrb[0].mxu0
        %v1771 = vadd.f32 %v1607, %v1770
        %v1772 = vpop.f32.mrb[0].mxu0
        %v1773 = vpop.f32.mrb[0].mxu0
        %v1774 = vadd.f32 %v1607, %v1773
        %v1775 = vpop.f32.mrb[0].mxu0
        %1776 = vmatprep.mubr.bf16.mxu0 %v1570
        %1777 = vmatmul.mubr.bf16.gmra.mrb[0].mxu0 %v1569
        %v1778 = vpop.f32.mrb[0].mxu0
        %v1779 = vadd.f32 %v1607, %v1778
        %v1780 = vpop.f32.mrb[0].mxu0
        %v1781 = vpop.f32.mrb[0].mxu0
        %v1782 = vadd.f32 %v1607, %v1781
        %v1783 = vpop.f32.mrb[0].mxu0
        %1784 = vmatprep.mubr.bf16.mxu0 %v1572
        %1785 = vmatmul.mubr.bf16.gmra.mrb[0].mxu0 %v1571
        %v1786 = vpop.f32.mrb[0].mxu0
        %v1787 = vadd.f32 %v1607, %v1786
        %v1788 = vpop.f32.mrb[0].mxu0
        %v1789 = vpop.f32.mrb[0].mxu0
        %v1790 = vadd.f32 %v1607, %v1789
        %v1791 = vpop.f32.mrb[0].mxu0
        %1792 = vmatprep.mubr.bf16.mxu0 %v1574
        %1793 = vmatmul.mubr.bf16.gmra.mrb[0].mxu0 %v1573
        %v1794 = vpop.f32.mrb[0].mxu0
        %v1795 = vadd.f32 %v1607, %v1794
        %v1796 = vpop.f32.mrb[0].mxu0
        %v1797 = vpop.f32.mrb[0].mxu0
        %v1798 = vadd.f32 %v1607, %v1797
        %v1799 = vpop.f32.mrb[0].mxu0
        %1800 = vdwg.mxu0
        %v1801 = vmax.f32 %v1739, 0.0
        %v1802 = vmax.f32 %v1742, 0.0
        %v1803 = vmax.f32 %v1747, 0.0
        %v1804 = vmax.f32 %v1750, 0.0
        %v1805 = vmax.f32 %v1755, 0.0
        %v1806 = vmax.f32 %v1758, 0.0
        %v1807 = vmax.f32 %v1763, 0.0
        %v1808 = vmax.f32 %v1766, 0.0
        %v1809 = vmax.f32 %v1771, 0.0
        %v1810 = vmax.f32 %v1774, 0.0
        %v1811 = vmax.f32 %v1779, 0.0
        %v1812 = vmax.f32 %v1782, 0.0
        %v1813 = vmax.f32 %v1787, 0.0
        %v1814 = vmax.f32 %v1790, 0.0
        %v1815 = vmax.f32 %v1795, 0.0
        %v1816 = vmax.f32 %v1798, 0.0
        %v1817 = vpack.c.bf16 %v1802, %v1801
        %v1818 = vpack.c.bf16 %v1804, %v1803
        %v1819 = vpack.c.bf16 %v1806, %v1805
        %v1820 = vpack.c.bf16 %v1808, %v1807
        %v1821 = vpack.c.bf16 %v1810, %v1809
        %v1822 = vpack.c.bf16 %v1812, %v1811
        %v1823 = vpack.c.bf16 %v1814, %v1813
        %v1824 = vpack.c.bf16 %v1816, %v1815
        %v1825 = vld [vmem:[#allocation7 + $0x80] sm:$0xf]
        %v1826 = vld [vmem:[#allocation7 + $0x84] sm:$0xf]
        %v1827 = vld [vmem:[#allocation7 + $0x88] sm:$0xf]
        %v1828 = vld [vmem:[#allocation7 + $0x8c] sm:$0xf]
        %v1829 = vld [vmem:[#allocation7 + $0x90] sm:$0xf]
        %v1830 = vld [vmem:[#allocation7 + $0x94] sm:$0xf]
        %v1831 = vld [vmem:[#allocation7 + $0x98] sm:$0xf]
        %v1832 = vld [vmem:[#allocation7 + $0x9c] sm:$0xf]
        %v1833 = vld [vmem:[#allocation7 + $0xa0] sm:$0xf]
        %v1834 = vld [vmem:[#allocation7 + $0xa4] sm:$0xf]
        %v1835 = vld [vmem:[#allocation7 + $0xa8] sm:$0xf]
        %v1836 = vld [vmem:[#allocation7 + $0xac] sm:$0xf]
        %v1837 = vld [vmem:[#allocation7 + $0xb0] sm:$0xf]
        %v1838 = vld [vmem:[#allocation7 + $0xb4] sm:$0xf]
        %v1839 = vld [vmem:[#allocation7 + $0xb8] sm:$0xf]
        %v1840 = vld [vmem:[#allocation7 + $0xbc] sm:$0xf]
        %v1841 = vld [vmem:[#allocation9 + $0x3] ss:$0 sm:$0xff]
        %v1858 = vunpack.c.l.b16 %v1825
        %v1859 = vunpack.c.l.b16 %v1826
        %v1860 = vunpack.c.l.b16 %v1827
        %v1861 = vunpack.c.l.b16 %v1828
        %v1862 = vunpack.c.l.b16 %v1829
        %v1863 = vunpack.c.l.b16 %v1830
        %v1864 = vunpack.c.l.b16 %v1831
        %v1865 = vunpack.c.l.b16 %v1832
        %v1866 = vunpack.c.l.b16 %v1833
        %v1867 = vunpack.c.l.b16 %v1834
        %v1868 = vunpack.c.l.b16 %v1835
        %v1869 = vunpack.c.l.b16 %v1836
        %v1870 = vunpack.c.l.b16 %v1837
        %v1871 = vunpack.c.l.b16 %v1838
        %v1872 = vunpack.c.l.b16 %v1839
        %v1873 = vunpack.c.l.b16 %v1840
        %v1874 = vpack.c.b16 %v1859, %v1858
        %v1875 = vpack.c.b16 %v1861, %v1860
        %v1876 = vpack.c.b16 %v1863, %v1862
        %v1877 = vpack.c.b16 %v1865, %v1864
        %v1878 = vpack.c.b16 %v1867, %v1866
        %v1879 = vpack.c.b16 %v1869, %v1868
        %v1880 = vpack.c.b16 %v1871, %v1870
        %v1881 = vpack.c.b16 %v1873, %v1872
        %1890 = vmatprep.subr.bf16.mxu0 0
        %1891 = vmatpush1.bf16.msra.mxu0 %v1874
        %1892 = vmatprep.subr.bf16.mxu0 0
        %1893 = vmatpush1.bf16.msra.mxu0 %v1875
        %1894 = vmatprep.subr.bf16.mxu0 0
        %1895 = vmatpush1.bf16.msra.mxu0 %v1876
        %1896 = vmatprep.subr.bf16.mxu0 0
        %1897 = vmatpush1.bf16.msra.mxu0 %v1877
        %1898 = vmatprep.subr.bf16.mxu0 0
        %1899 = vmatpush1.bf16.msra.mxu0 %v1878
        %1900 = vmatprep.subr.bf16.mxu0 0
        %1901 = vmatpush1.bf16.msra.mxu0 %v1879
        %1902 = vmatprep.subr.bf16.mxu0 0
        %1903 = vmatpush1.bf16.msra.mxu0 %v1880
        %1904 = vmatprep.subr.bf16.mxu0 0
        %1905 = vmatpush1.bf16.msra.mxu0 %v1881
        %1906 = vmatprep.subr.bf16.mxu0 0
        %1907 = vmatpush1.bf16.msra.mxu0 0
        %1908 = vmatprep.subr.bf16.mxu0 0
        %1909 = vmatpush1.bf16.msra.mxu0 0
        %1910 = vmatprep.subr.bf16.mxu0 0
        %1911 = vmatpush1.bf16.msra.mxu0 0
        %1912 = vmatprep.subr.bf16.mxu0 0
        %1913 = vmatpush1.bf16.msra.mxu0 0
        %1914 = vmatprep.subr.bf16.mxu0 0
        %1915 = vmatpush1.bf16.msra.mxu0 0
        %1916 = vmatprep.subr.bf16.mxu0 0
        %1917 = vmatpush1.bf16.msra.mxu0 0
        %1918 = vmatprep.subr.bf16.mxu0 0
        %1919 = vmatpush1.bf16.msra.mxu0 0
        %1920 = vmatprep.subr.bf16.mxu0 0
        %1921 = vmatpush1.bf16.msra.mxu0 0
        %1922 = vmatprep.mubr.bf16.mxu0 0
        %1923 = vmatmul.mubr.bf16.gmra.mrb[0].mxu0 %v1817
        %v1924 = vpop.f32.mrb[0].mxu0
        %v1925 = vadd.f32 %v1841, %v1924
        %v1926 = vpop.f32.mrb[0].mxu0
        %v1927 = vpop.f32.mrb[0].mxu0
        %v1928 = vadd.f32 %v1841, %v1927
        %v1929 = vpop.f32.mrb[0].mxu0
        %1930 = vmatprep.mubr.bf16.mxu0 0
        %1931 = vmatmul.mubr.bf16.gmra.mrb[0].mxu0 %v1818
        %v1932 = vpop.f32.mrb[0].mxu0
        %v1933 = vadd.f32 %v1841, %v1932
        %v1934 = vpop.f32.mrb[0].mxu0
        %v1935 = vpop.f32.mrb[0].mxu0
        %v1936 = vadd.f32 %v1841, %v1935
        %v1937 = vpop.f32.mrb[0].mxu0
        %1938 = vmatprep.mubr.bf16.mxu0 0
        %1939 = vmatmul.mubr.bf16.gmra.mrb[0].mxu0 %v1819
        %v1940 = vpop.f32.mrb[0].mxu0
        %v1941 = vadd.f32 %v1841, %v1940
        %v1942 = vpop.f32.mrb[0].mxu0
        %v1943 = vpop.f32.mrb[0].mxu0
        %v1944 = vadd.f32 %v1841, %v1943
        %v1945 = vpop.f32.mrb[0].mxu0
        %1946 = vmatprep.mubr.bf16.mxu0 0
        %1947 = vmatmul.mubr.bf16.gmra.mrb[0].mxu0 %v1820
        %v1948 = vpop.f32.mrb[0].mxu0
        %v1949 = vadd.f32 %v1841, %v1948
        %v1950 = vpop.f32.mrb[0].mxu0
        %v1951 = vpop.f32.mrb[0].mxu0
        %v1952 = vadd.f32 %v1841, %v1951
        %v1953 = vpop.f32.mrb[0].mxu0
        %1954 = vmatprep.mubr.bf16.mxu0 0
        %1955 = vmatmul.mubr.bf16.gmra.mrb[0].mxu0 %v1821
        %v1956 = vpop.f32.mrb[0].mxu0
        %v1957 = vadd.f32 %v1841, %v1956
        %v1958 = vpop.f32.mrb[0].mxu0
        %v1959 = vpop.f32.mrb[0].mxu0
        %v1960 = vadd.f32 %v1841, %v1959
        %v1961 = vpop.f32.mrb[0].mxu0
        %1962 = vmatprep.mubr.bf16.mxu0 0
        %1963 = vmatmul.mubr.bf16.gmra.mrb[0].mxu0 %v1822
        %v1964 = vpop.f32.mrb[0].mxu0
        %v1965 = vadd.f32 %v1841, %v1964
        %v1966 = vpop.f32.mrb[0].mxu0
        %v1967 = vpop.f32.mrb[0].mxu0
        %v1968 = vadd.f32 %v1841, %v1967
        %v1969 = vpop.f32.mrb[0].mxu0
        %1970 = vmatprep.mubr.bf16.mxu0 0
        %1971 = vmatmul.mubr.bf16.gmra.mrb[0].mxu0 %v1823
        %v1972 = vpop.f32.mrb[0].mxu0
        %v1973 = vadd.f32 %v1841, %v1972
        %v1974 = vpop.f32.mrb[0].mxu0
        %v1975 = vpop.f32.mrb[0].mxu0
        %v1976 = vadd.f32 %v1841, %v1975
        %v1977 = vpop.f32.mrb[0].mxu0
        %1978 = vmatprep.mubr.bf16.mxu0 0
        %1979 = vmatmul.mubr.bf16.gmra.mrb[0].mxu0 %v1824
        %v1980 = vpop.f32.mrb[0].mxu0
        %v1981 = vadd.f32 %v1841, %v1980
        %v1982 = vpop.f32.mrb[0].mxu0
        %v1983 = vpop.f32.mrb[0].mxu0
        %v1984 = vadd.f32 %v1841, %v1983
        %v1985 = vpop.f32.mrb[0].mxu0
        %1986 = vdwg.mxu0
        %v1987 = vmax.f32 %v1925, 0.0
        %v1988 = vmax.f32 %v1928, 0.0
        %v1989 = vmax.f32 %v1933, 0.0
        %v1990 = vmax.f32 %v1936, 0.0
        %v1991 = vmax.f32 %v1941, 0.0
        %v1992 = vmax.f32 %v1944, 0.0
        %v1993 = vmax.f32 %v1949, 0.0
        %v1994 = vmax.f32 %v1952, 0.0
        %v1995 = vmax.f32 %v1957, 0.0
        %v1996 = vmax.f32 %v1960, 0.0
        %v1997 = vmax.f32 %v1965, 0.0
        %v1998 = vmax.f32 %v1968, 0.0
        %v1999 = vmax.f32 %v1973, 0.0
        %v2000 = vmax.f32 %v1976, 0.0
        %v2001 = vmax.f32 %v1981, 0.0
        %v2002 = vmax.f32 %v1984, 0.0
        %v2003 = vpack.c.bf16 %v1988, %v1987
        %v2004 = vpack.c.bf16 %v1990, %v1989
        %v2005 = vpack.c.bf16 %v1992, %v1991
        %v2006 = vpack.c.bf16 %v1994, %v1993
        %v2007 = vpack.c.bf16 %v1996, %v1995
        %v2008 = vpack.c.bf16 %v1998, %v1997
        %v2009 = vpack.c.bf16 %v2000, %v1999
        %v2010 = vpack.c.bf16 %v2002, %v2001
        %v2011 = vld [vmem:[#allocation7 + $0xc0] sm:$0xf]
        %v2012 = vld [vmem:[#allocation7 + $0xc4] sm:$0xf]
        %v2013 = vld [vmem:[#allocation7 + $0xc8] sm:$0xf]
        %v2014 = vld [vmem:[#allocation7 + $0xcc] sm:$0xf]
        %v2015 = vld [vmem:[#allocation7 + $0xd0] sm:$0xf]
        %v2016 = vld [vmem:[#allocation7 + $0xd4] sm:$0xf]
        %v2017 = vld [vmem:[#allocation7 + $0xd8] sm:$0xf]
        %v2018 = vld [vmem:[#allocation7 + $0xdc] sm:$0xf]
        %v2019 = vld [vmem:[#allocation7 + $0xe0] sm:$0xf]
        %v2020 = vld [vmem:[#allocation7 + $0xe4] sm:$0xf]
        %v2021 = vld [vmem:[#allocation7 + $0xe8] sm:$0xf]
        %v2022 = vld [vmem:[#allocation7 + $0xec] sm:$0xf]
        %v2023 = vld [vmem:[#allocation7 + $0xf0] sm:$0xf]
        %v2024 = vld [vmem:[#allocation7 + $0xf4] sm:$0xf]
        %v2025 = vld [vmem:[#allocation7 + $0xf8] sm:$0xf]
        %v2026 = vld [vmem:[#allocation7 + $0xfc] sm:$0xf]
        %v2027 = vld [vmem:[#allocation9 + $0x4] ss:$0 sm:$0xff]
        %v2044 = vunpack.c.l.b16 %v2011
        %v2045 = vunpack.c.l.b16 %v2012
        %v2046 = vunpack.c.l.b16 %v2013
        %v2047 = vunpack.c.l.b16 %v2014
        %v2048 = vunpack.c.l.b16 %v2015
        %v2049 = vunpack.c.l.b16 %v2016
        %v2050 = vunpack.c.l.b16 %v2017
        %v2051 = vunpack.c.l.b16 %v2018
        %v2052 = vunpack.c.l.b16 %v2019
        %v2053 = vunpack.c.l.b16 %v2020
        %v2054 = vunpack.c.l.b16 %v2021
        %v2055 = vunpack.c.l.b16 %v2022
        %v2056 = vunpack.c.l.b16 %v2023
        %v2057 = vunpack.c.l.b16 %v2024
        %v2058 = vunpack.c.l.b16 %v2025
        %v2059 = vunpack.c.l.b16 %v2026
        %v2060 = vpack.c.b16 %v2045, %v2044
        %v2061 = vpack.c.b16 %v2047, %v2046
        %v2062 = vpack.c.b16 %v2049, %v2048
        %v2063 = vpack.c.b16 %v2051, %v2050
        %v2064 = vpack.c.b16 %v2053, %v2052
        %v2065 = vpack.c.b16 %v2055, %v2054
        %v2066 = vpack.c.b16 %v2057, %v2056
        %v2067 = vpack.c.b16 %v2059, %v2058
        %2076 = vmatprep.subr.bf16.mxu0 0
        %2077 = vmatpush1.bf16.msra.mxu0 %v2060
        %2078 = vmatprep.subr.bf16.mxu0 0
        %2079 = vmatpush1.bf16.msra.mxu0 %v2061
        %2080 = vmatprep.subr.bf16.mxu0 0
        %2081 = vmatpush1.bf16.msra.mxu0 %v2062
        %2082 = vmatprep.subr.bf16.mxu0 0
        %2083 = vmatpush1.bf16.msra.mxu0 %v2063
        %2084 = vmatprep.subr.bf16.mxu0 0
        %2085 = vmatpush1.bf16.msra.mxu0 %v2064
        %2086 = vmatprep.subr.bf16.mxu0 0
        %2087 = vmatpush1.bf16.msra.mxu0 %v2065
        %2088 = vmatprep.subr.bf16.mxu0 0
        %2089 = vmatpush1.bf16.msra.mxu0 %v2066
        %2090 = vmatprep.subr.bf16.mxu0 0
        %2091 = vmatpush1.bf16.msra.mxu0 %v2067
        %2092 = vmatprep.subr.bf16.mxu0 0
        %2093 = vmatpush1.bf16.msra.mxu0 0
        %2094 = vmatprep.subr.bf16.mxu0 0
        %2095 = vmatpush1.bf16.msra.mxu0 0
        %2096 = vmatprep.subr.bf16.mxu0 0
        %2097 = vmatpush1.bf16.msra.mxu0 0
        %2098 = vmatprep.subr.bf16.mxu0 0
        %2099 = vmatpush1.bf16.msra.mxu0 0
        %2100 = vmatprep.subr.bf16.mxu0 0
        %2101 = vmatpush1.bf16.msra.mxu0 0
        %2102 = vmatprep.subr.bf16.mxu0 0
        %2103 = vmatpush1.bf16.msra.mxu0 0
        %2104 = vmatprep.subr.bf16.mxu0 0
        %2105 = vmatpush1.bf16.msra.mxu0 0
        %2106 = vmatprep.subr.bf16.mxu0 0
        %2107 = vmatpush1.bf16.msra.mxu0 0
        %2108 = vmatprep.mubr.bf16.mxu0 0
        %2109 = vmatmul.mubr.bf16.gmra.mrb[0].mxu0 %v2003
        %v2110 = vpop.f32.mrb[0].mxu0
        %v2111 = vadd.f32 %v2027, %v2110
        %v2112 = vpop.f32.mrb[0].mxu0
        %v2113 = vpop.f32.mrb[0].mxu0
        %v2114 = vadd.f32 %v2027, %v2113
        %v2115 = vpop.f32.mrb[0].mxu0
        %2116 = vmatprep.mubr.bf16.mxu0 0
        %2117 = vmatmul.mubr.bf16.gmra.mrb[0].mxu0 %v2004
        %v2118 = vpop.f32.mrb[0].mxu0
        %v2119 = vadd.f32 %v2027, %v2118
        %v2120 = vpop.f32.mrb[0].mxu0
        %v2121 = vpop.f32.mrb[0].mxu0
        %v2122 = vadd.f32 %v2027, %v2121
        %v2123 = vpop.f32.mrb[0].mxu0
        %2124 = vmatprep.mubr.bf16.mxu0 0
        %2125 = vmatmul.mubr.bf16.gmra.mrb[0].mxu0 %v2005
        %v2126 = vpop.f32.mrb[0].mxu0
        %v2127 = vadd.f32 %v2027, %v2126
        %v2128 = vpop.f32.mrb[0].mxu0
        %v2129 = vpop.f32.mrb[0].mxu0
        %v2130 = vadd.f32 %v2027, %v2129
        %v2131 = vpop.f32.mrb[0].mxu0
        %2132 = vmatprep.mubr.bf16.mxu0 0
        %2133 = vmatmul.mubr.bf16.gmra.mrb[0].mxu0 %v2006
        %v2134 = vpop.f32.mrb[0].mxu0
        %v2135 = vadd.f32 %v2027, %v2134
        %v2136 = vpop.f32.mrb[0].mxu0
        %v2137 = vpop.f32.mrb[0].mxu0
        %v2138 = vadd.f32 %v2027, %v2137
        %v2139 = vpop.f32.mrb[0].mxu0
        %2140 = vmatprep.mubr.bf16.mxu0 0
        %2141 = vmatmul.mubr.bf16.gmra.mrb[0].mxu0 %v2007
        %v2142 = vpop.f32.mrb[0].mxu0
        %v2143 = vadd.f32 %v2027, %v2142
        %v2144 = vpop.f32.mrb[0].mxu0
        %v2145 = vpop.f32.mrb[0].mxu0
        %v2146 = vadd.f32 %v2027, %v2145
        %v2147 = vpop.f32.mrb[0].mxu0
        %2148 = vmatprep.mubr.bf16.mxu0 0
        %2149 = vmatmul.mubr.bf16.gmra.mrb[0].mxu0 %v2008
        %v2150 = vpop.f32.mrb[0].mxu0
        %v2151 = vadd.f32 %v2027, %v2150
        %v2152 = vpop.f32.mrb[0].mxu0
        %v2153 = vpop.f32.mrb[0].mxu0
        %v2154 = vadd.f32 %v2027, %v2153
        %v2155 = vpop.f32.mrb[0].mxu0
        %2156 = vmatprep.mubr.bf16.mxu0 0
        %2157 = vmatmul.mubr.bf16.gmra.mrb[0].mxu0 %v2009
        %v2158 = vpop.f32.mrb[0].mxu0
        %v2159 = vadd.f32 %v2027, %v2158
        %v2160 = vpop.f32.mrb[0].mxu0
        %v2161 = vpop.f32.mrb[0].mxu0
        %v2162 = vadd.f32 %v2027, %v2161
        %v2163 = vpop.f32.mrb[0].mxu0
        %2164 = vmatprep.mubr.bf16.mxu0 0
        %2165 = vmatmul.mubr.bf16.gmra.mrb[0].mxu0 %v2010
        %v2166 = vpop.f32.mrb[0].mxu0
        %v2167 = vadd.f32 %v2027, %v2166
        %v2168 = vpop.f32.mrb[0].mxu0
        %v2169 = vpop.f32.mrb[0].mxu0
        %v2170 = vadd.f32 %v2027, %v2169
        %v2171 = vpop.f32.mrb[0].mxu0
        %2172 = vdwg.mxu0
        %vm2173 = vcmask 64512
        %2174 = vst.msk [vmem:[%s301] sm:$0xff] %vm2173, %v2111
        %2175 = vst.msk [vmem:[%s301 + $0x8] sm:$0xff] %vm2173, %v2114
        %2176 = vst.msk [vmem:[%s301 + $0x10] sm:$0xff] %vm2173, %v2119
        %2177 = vst.msk [vmem:[%s301 + $0x18] sm:$0xff] %vm2173, %v2122
        %2178 = vst.msk [vmem:[%s301 + $0x20] sm:$0xff] %vm2173, %v2127
        %2179 = vst.msk [vmem:[%s301 + $0x28] sm:$0xff] %vm2173, %v2130
        %2180 = vst.msk [vmem:[%s301 + $0x30] sm:$0xff] %vm2173, %v2135
        %2181 = vst.msk [vmem:[%s301 + $0x38] sm:$0xff] %vm2173, %v2138
        %2182 = vst.msk [vmem:[%s301 + $0x40] sm:$0xff] %vm2173, %v2143
        %2183 = vst.msk [vmem:[%s301 + $0x48] sm:$0xff] %vm2173, %v2146
        %2184 = vst.msk [vmem:[%s301 + $0x50] sm:$0xff] %vm2173, %v2151
        %2185 = vst.msk [vmem:[%s301 + $0x58] sm:$0xff] %vm2173, %v2154
        %2186 = vst.msk [vmem:[%s301 + $0x60] sm:$0xff] %vm2173, %v2159
        %2187 = vst.msk [vmem:[%s301 + $0x68] sm:$0xff] %vm2173, %v2162
        %2188 = vst.msk [vmem:[%s301 + $0x70] sm:$0xff] %vm2173, %v2167
        %2189 = vst.msk [vmem:[%s301 + $0x78] sm:$0xff] %vm2173, %v2170
        %s2190 = smul.u32 16, %s21
        %p2191 = scmp.lt.s32.totalorder %s2190, 31
        %s2192 = scalar_select %p2191, %s2190, 31
        %s2193 = smul.addr %s2192, 8
        %s2194 = scalar_lea.vmem %s5, %s2193
        // Predicated region
        $region61: #{tpu_custom_call.1} parent=39 // pred_check
          %p2195 = pneg %p149
        $region62: #{tpu_custom_call.1} parent=39 // pred_check_branch
          %2197 = sbr.rel (%p2195) target = $region64
        $region63: #{tpu_custom_call.1} parent=39 // pred_region
          %s2198 = smul.u32 16, %s21
        $region64: #{tpu_custom_call.1} parent=39 // pred_fallthru
          _
      $region40: #{tpu_custom_call.1} parent=5 // pred_fallthru
        _
      %p2199 = scmp.le.s32.totalorder 2, %s16
      // Predicated region
      $region65: #{tpu_custom_call.1} parent=5 // pred_check
        %p2200 = pneg %p2199
      $region66: #{tpu_custom_call.1} parent=5 // pred_check_branch
        %2202 = sbr.rel (%p2200) target = $region68
      $region67: #{tpu_custom_call.1} parent=5 // pred_region
        %s2203 = ssub.s32 %s16, 2
        // Predicated region
        $region69: #{tpu_custom_call.1} parent=67 // pred_check
          %p2204 = pneg %p155
        $region70: #{tpu_custom_call.1} parent=67 // pred_check_branch
          %2206 = sbr.rel (%p2204) target = $region72
        $region71: #{tpu_custom_call.1} parent=67 // pred_region
          %s2207 = smul.u32 16, %s22
          %p2208 = scmp.lt.s32.totalorder %s2207, 31
          %s2209 = scalar_select %p2208, %s2207, 31
          %s2210 = smul.addr %s2209, 8
          %s2211 = scalar_lea.vmem %s5, %s2210
        $region72: #{tpu_custom_call.1} parent=67 // pred_fallthru
          _
      $region68: #{tpu_custom_call.1} parent=5 // pred_fallthru
        _
    $region6: #{tpu_custom_call.1} parent=1 // loop_footer
      %s20 = sadd.s32 1, %s16
    $region7: #{tpu_custom_call.1} parent=1 // loop_footer_branch
      %15 = sbr.rel target = $region3
    $region8: #{tpu_custom_call.1} parent=1 // loop_exit
      _
    %2212 = vsyncpa [#allocation3], 1
    %s2213 = scalar_lea.sflag [#allocation3], 1
    %2214 = vsyncpa %s2213, 1
    %2215 = vsyncpa [#allocation5], 1
    %2216 = vsyncpa [#allocation8], 1

</llo_original>
